<compile_context>
chip_gen: v6e
topology: v6e:2x2x1
jax: 0.10.0
libtpu: 0.0.40
codegen_flags: <defaults>
</compile_context>

<pallas_src>
import numpy as np
import jax
import jax.numpy as jnp
from jax import lax
from jax.experimental import pallas as pl
from jax.experimental.pallas import tpu as pltpu

MiB = 1 << 20
LANE = 128                      # lane-dense padding target for output feature dims
MATMUL_DTYPE = jnp.bfloat16     # MXU-native operand dtype (f32 accumulation kept)
NODE_ALIGN = 16 if MATMUL_DTYPE == jnp.bfloat16 else 8   # sublane packing of bf16
T_ALIGN = 8                     # neighbor-axis alignment (f32 q / w reshapes)


def _round_up(x, m):
    return ((x + m - 1) // m) * m


def _tpu_config():
    """Returns (dual_tensorcore, per-tile VMEM budget bytes, vmem_limit_bytes)."""
    kind = ""
    try:
        kind = (jax.devices()[0].device_kind or "").lower()
    except Exception:
        pass
    dual_tc = ("v7" in kind) or ("7x" in kind)
    vmem_cap = 64 * MiB if dual_tc else 128 * MiB
    try:  # refine from the runtime if available
        vmem_cap = int(pltpu.get_tpu_info().vmem_capacity_bytes)
    except Exception:
        pass
    budget = max(min(vmem_cap // 2, 48 * MiB), 8 * MiB)
    vmem_limit = max(min(vmem_cap - 16 * MiB, budget + 32 * MiB), 32 * MiB)
    return dual_tc, budget, vmem_limit


def _tile_vmem_bytes(nt, t_pad, fin, hid_p, fout_p):
    """Rough per-grid-step VMEM footprint used to size the node tile."""
    bf = jnp.dtype(MATMUL_DTYPE).itemsize
    f4 = 4
    # double-buffered streamed blocks
    io = 2 * (nt * fin * bf                 # h_self
              + nt * t_pad * fin * bf       # h_nb (pre-flattened)
              + nt * t_pad * f4             # nb_w
              + nt * fout_p * f4)           # output
    # resident weights (counted x2 in case single-buffering is unavailable)
    wts = 2 * (bf * (fin * hid_p + fin * fout_p + hid_p * fout_p)
               + f4 * (hid_p + fout_p))
    # in-kernel f32 temporaries (q, w*q, h_agg, h_new, norms)
    tmp = nt * t_pad * hid_p * f4 * 2 + nt * (2 * hid_p + 2 * fout_p) * f4
    return io + wts + tmp


def _pick_node_tile(n, t_pad, fin, hid_p, fout_p, dual_tc, budget_bytes):
    """Largest tile that fits the VMEM budget; even step count on dual-TC v7x."""
    n_al = _round_up(max(n, 1), NODE_ALIGN)
    cap = 256 if dual_tc else 512           # single TC: biggest tile wins
    nt = NODE_ALIGN
    cand = NODE_ALIGN
    while cand <= cap and _tile_vmem_bytes(cand, t_pad, fin, hid_p, fout_p) <= budget_bytes:
        nt = cand
        cand += NODE_ALIGN
    nt = min(nt, n_al)
    if dual_tc and n_al >= 2 * NODE_ALIGN:
        steps = max(2, -(-n_al // nt))
        if steps % 2:                       # keep both TensorCores busy
            steps += 1
        nt = _round_up(-(-n_al // steps), NODE_ALIGN)
        n_pad = nt * steps
    else:
        n_pad = _round_up(n_al, nt)
    return nt, n_pad


# ----------------------------- Pallas kernel -------------------------------
def pinsage_conv_kernel(hs_ref, hn_ref, w_ref, qw_ref, qb_ref,
                        ww1_ref, ww2_ref, wb_ref, out_ref):
    """One tile of NB nodes.

    hs_ref : (NB, Fin)        bf16 self embeddings
    hn_ref : (NB*Tp, Fin)     bf16 neighbor embeddings (pre-flattened, Tp = T padded to 8)
    w_ref  : (NB, Tp, 1)      f32 neighbor weights (0 for padded neighbors)
    qw_ref : (Fin, Hp)   qb_ref : (1, Hp)       Q linear (transposed weight, Hp lane-padded)
    ww1_ref: (Fin, Fp)   ww2_ref: (Hp, Fp)  wb_ref: (1, Fp)
        (W split so that cat([h_self, h_agg]) @ W == h_self@W1 + h_agg@W2)
    out_ref: (NB, Fp)         f32, lane-dense store
    """
    nb, t_pad, _ = w_ref.shape
    hid_p = qw_ref.shape[1]

    # --- ReLU(Q(h_neighbors)): one (NB*Tp, Fin)@(Fin, Hp) bf16 MXU matmul ---
    q = jnp.dot(hn_ref[...], qw_ref[...], preferred_element_type=jnp.float32)
    q = jnp.maximum(q + qb_ref[...], 0.0).reshape(nb, t_pad, hid_p)

    # --- weighted aggregation over Tp neighbors (lane-broadcast + sublane reduce) ---
    w = w_ref[...]                                           # (NB, Tp, 1)
    acc = jnp.sum(w * q, axis=1)                             # (NB, Hp)
    wsum = jnp.sum(w, axis=1)                                # (NB, 1)
    inv_wsum = pl.reciprocal(jnp.maximum(wsum, 1e-12), approx=True)  # EUP
    h_agg = acc * inv_wsum

    # --- ReLU(W([h_self, h_agg])) as two bf16 MXU matmuls, shared f32 acc ---
    h_new = (jnp.dot(hs_ref[...], ww1_ref[...], preferred_element_type=jnp.float32)
             + jnp.dot(h_agg.astype(ww2_ref.dtype), ww2_ref[...],
                       preferred_element_type=jnp.float32)
             + wb_ref[...])
    h_new = jnp.maximum(h_new, 0.0)

    # --- L2 row normalization (EUP rsqrt, eps-guarded) ---
    norm_sq = jnp.sum(h_new * h_new, axis=1, keepdims=True)
    out_ref[...] = (h_new * lax.rsqrt(jnp.maximum(norm_sq, 1e-12))).astype(out_ref.dtype)


_SINGLE_BUFFER_WEIGHTS_OK = [True]   # flipped off once if pl.Buffered(1) is unsupported


def _conv_call(h_self, h_nb_flat, nb_w, qw, qb, ww1, ww2, wb,
               node_tile, n_pad, t_pad, fin, hid_p, fout_p,
               vmem_limit, single_buffer_weights):
    def wspec(shape):
        idx = lambda i, _n=len(shape): (0,) * _n
        if single_buffer_weights:
            # grid-invariant operands: fetched once, no double-buffer VMEM cost
            return pl.BlockSpec(shape, idx, pipeline_mode=pl.Buffered(buffer_count=1))
        return pl.BlockSpec(shape, idx)

    return pl.pallas_call(
        pinsage_conv_kernel,
        out_shape=jax.ShapeDtypeStruct((n_pad, fout_p), jnp.float32),
        grid=(n_pad // node_tile,),
        in_specs=[
            pl.BlockSpec((node_tile, fin), lambda i: (i, 0)),
            pl.BlockSpec((node_tile * t_pad, fin), lambda i: (i, 0)),
            pl.BlockSpec((node_tile, t_pad, 1), lambda i: (i, 0, 0)),
            wspec((fin, hid_p)),
            wspec((1, hid_p)),
            wspec((fin, fout_p)),
            wspec((hid_p, fout_p)),
            wspec((1, fout_p)),
        ],
        out_specs=pl.BlockSpec((node_tile, fout_p), lambda i: (i, 0)),
        compiler_params=pltpu.CompilerParams(
            dimension_semantics=("parallel",),
            vmem_limit_bytes=int(vmem_limit)),
    )(h_self, h_nb_flat, nb_w, qw, qb, ww1, ww2, wb)


def pinsage_conv(h, ns, nb_nodes, nb_weights, lp, hw_cfg):
    """One PinSageConv layer. h is the full (f32) embedding table."""
    dual_tc, budget, vmem_limit = hw_cfg
    fin, fout = lp["fin"], lp["fout"]
    hid_p, fout_p = lp["hid_p"], lp["fout_p"]
    assert h.shape[1] == fin
    n = int(ns.shape[0])
    t = int(nb_nodes.shape[1])
    t_pad = _round_up(t, T_ALIGN)
    node_tile, n_pad = _pick_node_tile(n, t_pad, fin, hid_p, fout_p, dual_tc, budget)

    # Pad only the small index / weight tensors; the dominant neighbor tensor is
    # gathered straight into its padded, pre-flattened bf16 layout (no separate
    # jnp.pad rewrite of the big tensor, no contraction-dim zero padding).
    ns_p = jnp.pad(ns, (0, n_pad - n))
    nb_n_p = jnp.pad(nb_nodes, ((0, n_pad - n), (0, t_pad - t)))
    nb_w_p = jnp.pad(nb_weights.astype(jnp.float32),
                     ((0, n_pad - n), (0, t_pad - t)))[:, :, None]

    h_self = h[ns_p].astype(MATMUL_DTYPE)                      # (n_pad, Fin) bf16
    h_nb = h[nb_n_p.reshape(-1)].astype(MATMUL_DTYPE)          # (n_pad*Tp, Fin) bf16
    # TODO(synk): fuse this gather (and the output scatter) into the kernel via
    #             PrefetchScalarGridSpec + pl.Element row index maps.

    args = (h_self, h_nb, nb_w_p, lp["qw"], lp["qb"], lp["ww1"], lp["ww2"], lp["wb"])
    dims = (node_tile, n_pad, t_pad, fin, hid_p, fout_p, vmem_limit)
    if _SINGLE_BUFFER_WEIGHTS_OK[0]:
        try:
            out = jax.block_until_ready(_conv_call(*args, *dims, True))
        except Exception:
            _SINGLE_BUFFER_WEIGHTS_OK[0] = False   # Buffered(1) unsupported here
            out = _conv_call(*args, *dims, False)
    else:
        out = _conv_call(*args, *dims, False)
    return out[:n, :fout]


# ----------------------------- host-side glue -------------------------------
def random_walk_distribution(succ, nodeset, n_traces, n_hops, num_total, key):
    n = nodeset.shape[0]
    deg = succ.shape[1]
    cur = jnp.broadcast_to(nodeset[:, None], (n, n_traces))
    visited = []
    for _ in range(n_hops):
        key, sub = jax.random.split(key)
        choice = jax.random.randint(sub, (n, n_traces), 0, deg)
        cur = succ[cur, choice]
        visited.append(cur)
    visited = jnp.stack(visited, axis=2).reshape(n, n_traces * n_hops)
    counts = jnp.zeros((n, num_total), jnp.float32).at[
        jnp.arange(n)[:, None], visited].add(1.0)
    return counts / counts.sum(1, keepdims=True)


def random_walk_nodeflow(succ, nodeset, n_layers, n_traces, n_hops, top_t, key):
    nodeflow = []
    cur = np.asarray(nodeset)
    num_total = succ.shape[0]
    for _ in reversed(range(n_layers)):
        key, sub = jax.random.split(key)
        prob = random_walk_distribution(succ, jnp.asarray(cur), n_traces,
                                        n_hops, num_total, sub)
        nb_weights, nb_nodes = jax.lax.top_k(prob, top_t)
        nodeflow.insert(0, (jnp.asarray(cur), nb_weights, nb_nodes))
        cur = np.unique(np.concatenate([np.asarray(nb_nodes).reshape(-1), cur]))
    return nodeflow


def init_params(feature_sizes, key):
    """PyTorch nn.Linear style uniform(-1/sqrt(fan_in), 1/sqrt(fan_in)) init (f32)."""
    params = []
    for i in range(len(feature_sizes) - 1):
        fin = feature_sizes[i]
        fout = feature_sizes[i + 1]
        hid = feature_sizes[i + 1]
        key, k1, k2, k3, k4 = jax.random.split(key, 5)
        bq = 1.0 / np.sqrt(fin)
        qw = jax.random.uniform(k1, (fin, hid), jnp.float32, -bq, bq)
        qb = jax.random.uniform(k2, (hid,), jnp.float32, -bq, bq)
        bw = 1.0 / np.sqrt(fin + hid)
        w_full = jax.random.uniform(k3, (fin + hid, fout), jnp.float32, -bw, bw)
        wb = jax.random.uniform(k4, (fout,), jnp.float32, -bw, bw)
        params.append((qw, qb, w_full[:fin], w_full[fin:], wb))
    return params


def prepare_params(params):
    """Pad only the output/lane dims (H, Fout) to 128 and cast the matmul
    weights to bf16 once at setup; biases stay f32 (added to the f32 acc)."""
    prepped = []
    for qw, qb, ww1, ww2, wb in params:
        fin, hid = qw.shape
        fout = ww1.shape[1]
        hid_p = _round_up(hid, LANE)
        fout_p = _round_up(fout, LANE)
        prepped.append(dict(
            fin=fin, hid=hid, fout=fout, hid_p=hid_p, fout_p=fout_p,
            qw=jnp.pad(qw, ((0, 0), (0, hid_p - hid))).astype(MATMUL_DTYPE),
            qb=jnp.pad(qb.reshape(1, -1), ((0, 0), (0, hid_p - hid))).astype(jnp.float32),
            ww1=jnp.pad(ww1, ((0, 0), (0, fout_p - fout))).astype(MATMUL_DTYPE),
            ww2=jnp.pad(ww2, ((0, hid_p - hid), (0, fout_p - fout))).astype(MATMUL_DTYPE),
            wb=jnp.pad(wb.reshape(1, -1), ((0, 0), (0, fout_p - fout))).astype(jnp.float32),
        ))
    return prepped


def pinsage_forward(h, nodeset, succ, params, top_t, n_traces, n_hops, key):
    hw_cfg = _tpu_config()
    n_layers = len(params)
    nodeflow = random_walk_nodeflow(succ, nodeset, n_layers, n_traces,
                                    n_hops, top_t, key)
    for i, (ns, nb_w, nb_n) in enumerate(nodeflow):
        new_emb = pinsage_conv(h, ns, nb_n, nb_w, params[i], hw_cfg)
        h = h.at[ns].set(new_emb)                             # put_embeddings
        # TODO(synk): h.at[ns].set copies the full table each layer; fuse the
        #             scatter into the kernel's out_spec at production sizes.
    return h[nodeset]                                         # get_embeddings


# ---------------------------------- main ------------------------------------
if __name__ == "__main__":
    key = jax.random.PRNGKey(0)
    k_graph, k_feat, k_nodes, k_params, k_walk = jax.random.split(key, 5)

    num_total_nodes = 32
    degree = 4
    feature_sizes = [32, 32, 32]      # in / hidden / out (equal so scatter fits)
    T = 4                             # top-T neighbors
    n_traces = 8
    n_hops = 2
    batch_nodes = 6

    # synthetic graph: fixed out-degree successor table
    succ = jax.random.randint(k_graph, (num_total_nodes, degree),
                              0, num_total_nodes)
    h = jax.random.normal(k_feat, (num_total_nodes, feature_sizes[0]),
                          jnp.float32)
    nodeset = jnp.asarray(np.sort(np.asarray(
        jax.random.choice(k_nodes, num_total_nodes, (batch_nodes,),
                          replace=False))))

    params = prepare_params(init_params(feature_sizes, k_params))

    out = pinsage_forward(h, nodeset, succ, params, T, n_traces, n_hops, k_walk)
    out = jax.block_until_ready(out)

    assert out.shape == (batch_nodes, feature_sizes[-1])
    assert bool(jnp.all(jnp.isfinite(out)))
    # rows should be L2-normalized
    assert bool(jnp.allclose(jnp.linalg.norm(out, axis=1), 1.0, atol=1e-4))
    print("KERNEL_OK")
</pallas_src>

<mosaic_0001>
module attributes {stable_mosaic.version = 11 : i64} {
  func.func @pinsage_conv_kernel(%arg0: i32, %arg1: memref<16x32xbf16, #tpu.memory_space<vmem>>, %arg2: memref<128x32xbf16, #tpu.memory_space<vmem>>, %arg3: memref<16x8x1xf32, #tpu.memory_space<vmem>>, %arg4: memref<32x128xbf16, #tpu.memory_space<vmem>>, %arg5: memref<1x128xf32, #tpu.memory_space<vmem>>, %arg6: memref<32x128xbf16, #tpu.memory_space<vmem>>, %arg7: memref<128x128xbf16, #tpu.memory_space<vmem>>, %arg8: memref<1x128xf32, #tpu.memory_space<vmem>>, %arg9: memref<16x128xf32, #tpu.memory_space<vmem>>) attributes {dimension_semantics = [#tpu.dimension_semantics<parallel>], iteration_bounds = array<i64: 1>, scalar_prefetch = 0 : i64, scratch_operands = 0 : i64, tpu.core_type = #tpu.core_type<tc>, window_params = [{transform_indices = @transform_0, window_bounds = array<i64: 16, 32>}, {transform_indices = @transform_1, window_bounds = array<i64: 128, 32>}, {transform_indices = @transform_2, window_bounds = array<i64: 16, 8, 1>}, {pipeline_mode = #tpu.pipeline_mode<synchronous>, transform_indices = @transform_3, window_bounds = array<i64: 32, 128>}, {pipeline_mode = #tpu.pipeline_mode<synchronous>, transform_indices = @transform_4, window_bounds = array<i64: 1, 128>}, {pipeline_mode = #tpu.pipeline_mode<synchronous>, transform_indices = @transform_5, window_bounds = array<i64: 32, 128>}, {pipeline_mode = #tpu.pipeline_mode<synchronous>, transform_indices = @transform_6, window_bounds = array<i64: 128, 128>}, {pipeline_mode = #tpu.pipeline_mode<synchronous>, transform_indices = @transform_7, window_bounds = array<i64: 1, 128>}, {transform_indices = @transform_8, window_bounds = array<i64: 16, 128>}]} {
    %c0 = arith.constant 0 : index
    %c0_0 = arith.constant 0 : index
    %0 = vector.load %arg2[%c0, %c0_0] : memref<128x32xbf16, #tpu.memory_space<vmem>>, vector<128x32xbf16>
    %c0_1 = arith.constant 0 : index
    %c0_2 = arith.constant 0 : index
    %1 = vector.load %arg4[%c0_1, %c0_2] : memref<32x128xbf16, #tpu.memory_space<vmem>>, vector<32x128xbf16>
    %cst = arith.constant dense<0.000000e+00> : vector<128x128xf32>
    %2 = tpu.matmul %0, %1, %cst {dimension_numbers = #tpu.dot_dimension_numbers<[1], [0], [0], [1], [0, 0, 1, 1], [], []>} : vector<128x32xbf16>, vector<32x128xbf16>, vector<128x128xf32> -> vector<128x128xf32>
    %c0_3 = arith.constant 0 : index
    %c0_4 = arith.constant 0 : index
    %3 = vector.load %arg5[%c0_3, %c0_4] : memref<1x128xf32, #tpu.memory_space<vmem>>, vector<1x128xf32>
    %4 = vector.broadcast %3 : vector<1x128xf32> to vector<128x128xf32>
    %5 = arith.addf %2, %4 : vector<128x128xf32>
    %cst_5 = arith.constant 0.000000e+00 : f32
    %6 = vector.broadcast %cst_5 : f32 to vector<128x128xf32>
    %7 = arith.maximumf %5, %6 : vector<128x128xf32>
    %8 = vector.shape_cast %7 : vector<128x128xf32> to vector<16x8x128xf32>
    %c0_6 = arith.constant 0 : index
    %c0_7 = arith.constant 0 : index
    %c0_8 = arith.constant 0 : index
    %9 = vector.load %arg3[%c0_6, %c0_7, %c0_8] : memref<16x8x1xf32, #tpu.memory_space<vmem>>, vector<16x8x1xf32>
    %10 = vector.broadcast %9 : vector<16x8x1xf32> to vector<16x8x128xf32>
    %11 = arith.mulf %10, %8 : vector<16x8x128xf32>
    %cst_9 = arith.constant dense<0.000000e+00> : vector<16x128xf32>
    %12 = vector.multi_reduction <add>, %11, %cst_9 [1] : vector<16x8x128xf32> to vector<16x128xf32>
    %cst_10 = arith.constant dense<0.000000e+00> : vector<16x1xf32>
    %13 = vector.multi_reduction <add>, %9, %cst_10 [1] : vector<16x8x1xf32> to vector<16x1xf32>
    %cst_11 = arith.constant 9.99999996E-13 : f32
    %14 = vector.broadcast %cst_11 : f32 to vector<16x1xf32>
    %15 = arith.maximumf %13, %14 : vector<16x1xf32>
    %16 = tpu.reciprocal %15 {approx = true} : vector<16x1xf32> -> vector<16x1xf32>
    %17 = vector.broadcast %16 : vector<16x1xf32> to vector<16x128xf32>
    %18 = arith.mulf %12, %17 : vector<16x128xf32>
    %c0_12 = arith.constant 0 : index
    %c0_13 = arith.constant 0 : index
    %19 = vector.load %arg1[%c0_12, %c0_13] : memref<16x32xbf16, #tpu.memory_space<vmem>>, vector<16x32xbf16>
    %c0_14 = arith.constant 0 : index
    %c0_15 = arith.constant 0 : index
    %20 = vector.load %arg6[%c0_14, %c0_15] : memref<32x128xbf16, #tpu.memory_space<vmem>>, vector<32x128xbf16>
    %cst_16 = arith.constant dense<0.000000e+00> : vector<16x128xf32>
    %21 = tpu.matmul %19, %20, %cst_16 {dimension_numbers = #tpu.dot_dimension_numbers<[1], [0], [0], [1], [0, 0, 1, 1], [], []>} : vector<16x32xbf16>, vector<32x128xbf16>, vector<16x128xf32> -> vector<16x128xf32>
    %22 = arith.truncf %18 : vector<16x128xf32> to vector<16x128xbf16>
    %c0_17 = arith.constant 0 : index
    %c0_18 = arith.constant 0 : index
    %23 = vector.load %arg7[%c0_17, %c0_18] : memref<128x128xbf16, #tpu.memory_space<vmem>>, vector<128x128xbf16>
    %cst_19 = arith.constant dense<0.000000e+00> : vector<16x128xf32>
    %24 = tpu.matmul %22, %23, %cst_19 {dimension_numbers = #tpu.dot_dimension_numbers<[1], [0], [0], [1], [0, 0, 1, 1], [], []>} : vector<16x128xbf16>, vector<128x128xbf16>, vector<16x128xf32> -> vector<16x128xf32>
    %25 = arith.addf %21, %24 : vector<16x128xf32>
    %c0_20 = arith.constant 0 : index
    %c0_21 = arith.constant 0 : index
    %26 = vector.load %arg8[%c0_20, %c0_21] : memref<1x128xf32, #tpu.memory_space<vmem>>, vector<1x128xf32>
    %27 = vector.broadcast %26 : vector<1x128xf32> to vector<16x128xf32>
    %28 = arith.addf %25, %27 : vector<16x128xf32>
    %cst_22 = arith.constant 0.000000e+00 : f32
    %29 = vector.broadcast %cst_22 : f32 to vector<16x128xf32>
    %30 = arith.maximumf %28, %29 : vector<16x128xf32>
    %31 = arith.mulf %30, %30 : vector<16x128xf32>
    %cst_23 = arith.constant dense<0.000000e+00> : vector<16xf32>
    %32 = vector.multi_reduction <add>, %31, %cst_23 [1] : vector<16x128xf32> to vector<16xf32>
    %33 = vector.shape_cast %32 : vector<16xf32> to vector<16x1xf32>
    %cst_24 = arith.constant 9.99999996E-13 : f32
    %34 = vector.broadcast %cst_24 : f32 to vector<16x1xf32>
    %35 = arith.maximumf %33, %34 : vector<16x1xf32>
    %36 = math.rsqrt %35 : vector<16x1xf32>
    %37 = vector.broadcast %36 : vector<16x1xf32> to vector<16x128xf32>
    %38 = arith.mulf %30, %37 : vector<16x128xf32>
    %c0_25 = arith.constant 0 : index
    %c0_26 = arith.constant 0 : index
    %39 = vector.load %arg9[%c0_25, %c0_26] : memref<16x128xf32, #tpu.memory_space<vmem>>, vector<16x128xf32>
    tpu.vector_store %arg9[%c0_25, %c0_26], %38 {strides = array<i32>} : memref<16x128xf32, #tpu.memory_space<vmem>>, vector<16x128xf32>,
    return
  }
  func.func @transform_0(%arg0: i32) -> (i32, i32) {
    %c0_i32 = arith.constant 0 : i32
    %c0_i32_0 = arith.constant 0 : i32
    return %arg0, %c0_i32 : i32, i32
  }
  func.func @transform_1(%arg0: i32) -> (i32, i32) {
    %c0_i32 = arith.constant 0 : i32
    %c0_i32_0 = arith.constant 0 : i32
    return %arg0, %c0_i32 : i32, i32
  }
  func.func @transform_2(%arg0: i32) -> (i32, i32, i32) {
    %c0_i32 = arith.constant 0 : i32
    %c0_i32_0 = arith.constant 0 : i32
    %c0_i32_1 = arith.constant 0 : i32
    return %arg0, %c0_i32, %c0_i32_0 : i32, i32, i32
  }
  func.func @transform_3(%arg0: i32) -> (i32, i32) {
    %c0_i32 = arith.constant 0 : i32
    %c0_i32_0 = arith.constant 0 : i32
    %c0_i32_1 = arith.constant 0 : i32
    return %c0_i32, %c0_i32_0 : i32, i32
  }
  func.func @transform_4(%arg0: i32) -> (i32, i32) {
    %c0_i32 = arith.constant 0 : i32
    %c0_i32_0 = arith.constant 0 : i32
    %c0_i32_1 = arith.constant 0 : i32
    return %c0_i32, %c0_i32_0 : i32, i32
  }
  func.func @transform_5(%arg0: i32) -> (i32, i32) {
    %c0_i32 = arith.constant 0 : i32
    %c0_i32_0 = arith.constant 0 : i32
    %c0_i32_1 = arith.constant 0 : i32
    return %c0_i32, %c0_i32_0 : i32, i32
  }
  func.func @transform_6(%arg0: i32) -> (i32, i32) {
    %c0_i32 = arith.constant 0 : i32
    %c0_i32_0 = arith.constant 0 : i32
    %c0_i32_1 = arith.constant 0 : i32
    return %c0_i32, %c0_i32_0 : i32, i32
  }
  func.func @transform_7(%arg0: i32) -> (i32, i32) {
    %c0_i32 = arith.constant 0 : i32
    %c0_i32_0 = arith.constant 0 : i32
    %c0_i32_1 = arith.constant 0 : i32
    return %c0_i32, %c0_i32_0 : i32, i32
  }
  func.func @transform_8(%arg0: i32) -> (i32, i32) {
    %c0_i32 = arith.constant 0 : i32
    %c0_i32_0 = arith.constant 0 : i32
    return %arg0, %c0_i32 : i32, i32
  }
}

module attributes {stable_mosaic.version = 11 : i64} {
  func.func @pinsage_conv_kernel(%arg0: i32, %arg1: memref<16x32xbf16, #tpu.memory_space<vmem>>, %arg2: memref<128x32xbf16, #tpu.memory_space<vmem>>, %arg3: memref<16x8x1xf32, #tpu.memory_space<vmem>>, %arg4: memref<32x128xbf16, #tpu.memory_space<vmem>>, %arg5: memref<1x128xf32, #tpu.memory_space<vmem>>, %arg6: memref<32x128xbf16, #tpu.memory_space<vmem>>, %arg7: memref<128x128xbf16, #tpu.memory_space<vmem>>, %arg8: memref<1x128xf32, #tpu.memory_space<vmem>>, %arg9: memref<16x128xf32, #tpu.memory_space<vmem>>) attributes {dimension_semantics = [#tpu.dimension_semantics<parallel>], iteration_bounds = array<i64: 1>, scalar_prefetch = 0 : i64, scratch_operands = 0 : i64, tpu.core_type = #tpu.core_type<tc>, window_params = [{transform_indices = @transform_0, window_bounds = array<i64: 16, 32>}, {transform_indices = @transform_1, window_bounds = array<i64: 128, 32>}, {transform_indices = @transform_2, window_bounds = array<i64: 16, 8, 1>}, {pipeline_mode = #tpu.pipeline_mode<synchronous>, transform_indices = @transform_3, window_bounds = array<i64: 32, 128>}, {pipeline_mode = #tpu.pipeline_mode<synchronous>, transform_indices = @transform_4, window_bounds = array<i64: 1, 128>}, {pipeline_mode = #tpu.pipeline_mode<synchronous>, transform_indices = @transform_5, window_bounds = array<i64: 32, 128>}, {pipeline_mode = #tpu.pipeline_mode<synchronous>, transform_indices = @transform_6, window_bounds = array<i64: 128, 128>}, {pipeline_mode = #tpu.pipeline_mode<synchronous>, transform_indices = @transform_7, window_bounds = array<i64: 1, 128>}, {transform_indices = @transform_8, window_bounds = array<i64: 16, 128>}]} {
    %c0 = arith.constant 0 : index
    %c0_0 = arith.constant 0 : index
    %0 = vector.load %arg2[%c0, %c0_0] : memref<128x32xbf16, #tpu.memory_space<vmem>>, vector<128x32xbf16>
    %c0_1 = arith.constant 0 : index
    %c0_2 = arith.constant 0 : index
    %1 = vector.load %arg4[%c0_1, %c0_2] : memref<32x128xbf16, #tpu.memory_space<vmem>>, vector<32x128xbf16>
    %cst = arith.constant dense<0.000000e+00> : vector<128x128xf32>
    %2 = tpu.matmul %0, %1, %cst {dimension_numbers = #tpu.dot_dimension_numbers<[1], [0], [0], [1], [0, 0, 1, 1], [], []>} : vector<128x32xbf16>, vector<32x128xbf16>, vector<128x128xf32> -> vector<128x128xf32>
    %c0_3 = arith.constant 0 : index
    %c0_4 = arith.constant 0 : index
    %3 = vector.load %arg5[%c0_3, %c0_4] : memref<1x128xf32, #tpu.memory_space<vmem>>, vector<1x128xf32>
    %4 = vector.broadcast %3 : vector<1x128xf32> to vector<128x128xf32>
    %5 = arith.addf %2, %4 : vector<128x128xf32>
    %cst_5 = arith.constant 0.000000e+00 : f32
    %6 = vector.broadcast %cst_5 : f32 to vector<128x128xf32>
    %7 = arith.maximumf %5, %6 : vector<128x128xf32>
    %8 = vector.shape_cast %7 : vector<128x128xf32> to vector<16x8x128xf32>
    %c0_6 = arith.constant 0 : index
    %c0_7 = arith.constant 0 : index
    %c0_8 = arith.constant 0 : index
    %9 = vector.load %arg3[%c0_6, %c0_7, %c0_8] : memref<16x8x1xf32, #tpu.memory_space<vmem>>, vector<16x8x1xf32>
    %10 = vector.broadcast %9 : vector<16x8x1xf32> to vector<16x8x128xf32>
    %11 = arith.mulf %10, %8 : vector<16x8x128xf32>
    %cst_9 = arith.constant dense<0.000000e+00> : vector<16x128xf32>
    %12 = vector.multi_reduction <add>, %11, %cst_9 [1] : vector<16x8x128xf32> to vector<16x128xf32>
    %cst_10 = arith.constant dense<0.000000e+00> : vector<16x1xf32>
    %13 = vector.multi_reduction <add>, %9, %cst_10 [1] : vector<16x8x1xf32> to vector<16x1xf32>
    %cst_11 = arith.constant 9.99999996E-13 : f32
    %14 = vector.broadcast %cst_11 : f32 to vector<16x1xf32>
    %15 = arith.maximumf %13, %14 : vector<16x1xf32>
    %16 = tpu.reciprocal %15 {approx = true} : vector<16x1xf32> -> vector<16x1xf32>
    %17 = vector.broadcast %16 : vector<16x1xf32> to vector<16x128xf32>
    %18 = arith.mulf %12, %17 : vector<16x128xf32>
    %c0_12 = arith.constant 0 : index
    %c0_13 = arith.constant 0 : index
    %19 = vector.load %arg1[%c0_12, %c0_13] : memref<16x32xbf16, #tpu.memory_space<vmem>>, vector<16x32xbf16>
    %c0_14 = arith.constant 0 : index
    %c0_15 = arith.constant 0 : index
    %20 = vector.load %arg6[%c0_14, %c0_15] : memref<32x128xbf16, #tpu.memory_space<vmem>>, vector<32x128xbf16>
    %cst_16 = arith.constant dense<0.000000e+00> : vector<16x128xf32>
    %21 = tpu.matmul %19, %20, %cst_16 {dimension_numbers = #tpu.dot_dimension_numbers<[1], [0], [0], [1], [0, 0, 1, 1], [], []>} : vector<16x32xbf16>, vector<32x128xbf16>, vector<16x128xf32> -> vector<16x128xf32>
    %22 = arith.truncf %18 : vector<16x128xf32> to vector<16x128xbf16>
    %c0_17 = arith.constant 0 : index
    %c0_18 = arith.constant 0 : index
    %23 = vector.load %arg7[%c0_17, %c0_18] : memref<128x128xbf16, #tpu.memory_space<vmem>>, vector<128x128xbf16>
    %cst_19 = arith.constant dense<0.000000e+00> : vector<16x128xf32>
    %24 = tpu.matmul %22, %23, %cst_19 {dimension_numbers = #tpu.dot_dimension_numbers<[1], [0], [0], [1], [0, 0, 1, 1], [], []>} : vector<16x128xbf16>, vector<128x128xbf16>, vector<16x128xf32> -> vector<16x128xf32>
    %25 = arith.addf %21, %24 : vector<16x128xf32>
    %c0_20 = arith.constant 0 : index
    %c0_21 = arith.constant 0 : index
    %26 = vector.load %arg8[%c0_20, %c0_21] : memref<1x128xf32, #tpu.memory_space<vmem>>, vector<1x128xf32>
    %27 = vector.broadcast %26 : vector<1x128xf32> to vector<16x128xf32>
    %28 = arith.addf %25, %27 : vector<16x128xf32>
    %cst_22 = arith.constant 0.000000e+00 : f32
    %29 = vector.broadcast %cst_22 : f32 to vector<16x128xf32>
    %30 = arith.maximumf %28, %29 : vector<16x128xf32>
    %31 = arith.mulf %30, %30 : vector<16x128xf32>
    %cst_23 = arith.constant dense<0.000000e+00> : vector<16xf32>
    %32 = vector.multi_reduction <add>, %31, %cst_23 [1] : vector<16x128xf32> to vector<16xf32>
    %33 = vector.shape_cast %32 : vector<16xf32> to vector<16x1xf32>
    %cst_24 = arith.constant 9.99999996E-13 : f32
    %34 = vector.broadcast %cst_24 : f32 to vector<16x1xf32>
    %35 = arith.maximumf %33, %34 : vector<16x1xf32>
    %36 = math.rsqrt %35 : vector<16x1xf32>
    %37 = vector.broadcast %36 : vector<16x1xf32> to vector<16x128xf32>
    %38 = arith.mulf %30, %37 : vector<16x128xf32>
    %c0_25 = arith.constant 0 : index
    %c0_26 = arith.constant 0 : index
    %39 = vector.load %arg9[%c0_25, %c0_26] : memref<16x128xf32, #tpu.memory_space<vmem>>, vector<16x128xf32>
    tpu.vector_store %arg9[%c0_25, %c0_26], %38 {strides = array<i32>} : memref<16x128xf32, #tpu.memory_space<vmem>>, vector<16x128xf32>,
    return
  }
  func.func @transform_0(%arg0: i32) -> (i32, i32) {
    %c0_i32 = arith.constant 0 : i32
    %c0_i32_0 = arith.constant 0 : i32
    return %arg0, %c0_i32 : i32, i32
  }
  func.func @transform_1(%arg0: i32) -> (i32, i32) {
    %c0_i32 = arith.constant 0 : i32
    %c0_i32_0 = arith.constant 0 : i32
    return %arg0, %c0_i32 : i32, i32
  }
  func.func @transform_2(%arg0: i32) -> (i32, i32, i32) {
    %c0_i32 = arith.constant 0 : i32
    %c0_i32_0 = arith.constant 0 : i32
    %c0_i32_1 = arith.constant 0 : i32
    return %arg0, %c0_i32, %c0_i32_0 : i32, i32, i32
  }
  func.func @transform_3(%arg0: i32) -> (i32, i32) {
    %c0_i32 = arith.constant 0 : i32
    %c0_i32_0 = arith.constant 0 : i32
    %c0_i32_1 = arith.constant 0 : i32
    return %c0_i32, %c0_i32_0 : i32, i32
  }
  func.func @transform_4(%arg0: i32) -> (i32, i32) {
    %c0_i32 = arith.constant 0 : i32
    %c0_i32_0 = arith.constant 0 : i32
    %c0_i32_1 = arith.constant 0 : i32
    return %c0_i32, %c0_i32_0 : i32, i32
  }
  func.func @transform_5(%arg0: i32) -> (i32, i32) {
    %c0_i32 = arith.constant 0 : i32
    %c0_i32_0 = arith.constant 0 : i32
    %c0_i32_1 = arith.constant 0 : i32
    return %c0_i32, %c0_i32_0 : i32, i32
  }
  func.func @transform_6(%arg0: i32) -> (i32, i32) {
    %c0_i32 = arith.constant 0 : i32
    %c0_i32_0 = arith.constant 0 : i32
    %c0_i32_1 = arith.constant 0 : i32
    return %c0_i32, %c0_i32_0 : i32, i32
  }
  func.func @transform_7(%arg0: i32) -> (i32, i32) {
    %c0_i32 = arith.constant 0 : i32
    %c0_i32_0 = arith.constant 0 : i32
    %c0_i32_1 = arith.constant 0 : i32
    return %c0_i32, %c0_i32_0 : i32, i32
  }
  func.func @transform_8(%arg0: i32) -> (i32, i32) {
    %c0_i32 = arith.constant 0 : i32
    %c0_i32_0 = arith.constant 0 : i32
    return %arg0, %c0_i32 : i32, i32
  }
}

</mosaic_0001>

<llo_original>
// kernel: tpu_custom_call.1
$region0: #{tpu_custom_call.1}
  #allocation0 [shape = 'u32[]', space=smem, size = 0x4, offset = 0x4, fixed_abs, tag = 'smem constant byte address 0x4 - core index']
  #allocation1 [shape = 'u32[144,128]{1,0:T(1,128)}', space=vmem, size = 0x12000, scoped, tag = 'internal scratch']
  %s0 = inlined_call_operand.vmem [shape: bf16[16,32], index: 0, kind: input, shape index: {}]
  %s1 = inlined_call_operand.vmem [shape: bf16[128,32], index: 1, kind: input, shape index: {}]
  %s2 = inlined_call_operand.vmem [shape: f32[16,8,1], index: 2, kind: input, shape index: {}]
  %s3 = inlined_call_operand.vmem [shape: bf16[32,128], index: 3, kind: input, shape index: {}]
  %s4 = inlined_call_operand.vmem [shape: f32[1,128], index: 4, kind: input, shape index: {}]
  %s5 = inlined_call_operand.vmem [shape: bf16[32,128], index: 5, kind: input, shape index: {}]
  %s6 = inlined_call_operand.vmem [shape: bf16[128,128], index: 6, kind: input, shape index: {}]
  %s7 = inlined_call_operand.vmem [shape: f32[1,128], index: 7, kind: input, shape index: {}]
  %s8 = inlined_call_operand.hbm [shape: f32[16,128], index: 8, kind: output, shape index: {}]
  %s9 = sld [smem:[#allocation0]]
  $region42: #{tpu_custom_call.1} parent=0
    _
  %s11 = ssub.s32 1, %s9
  %s12 = scalar_select 0, %s11, %s9
  $region1: #{tpu_custom_call.1} parent=0
    #allocation2 [shape = 'u8[8192]{0}', space=vmem, size = 0x2000, scoped, tag = 'output window, operand 0, single buffered']
    #allocation3 [shape = 's32[1]{0}', space=sflag, size = 0x4, scoped, tag = 'scoped memory for tpu_custom_call.1']
    %13 = vsyncpa [#allocation3], 0
    // Predicated region
    $region2: #{tpu_custom_call.1} parent=1 // pred_check
      _
    $region3: #{tpu_custom_call.1} parent=1 // pred_check_branch
      %15 = sbr.rel (0) target = $region5
    $region4: #{tpu_custom_call.1} parent=1 // pred_region
      _
    $region5: #{tpu_custom_call.1} parent=1 // pred_fallthru
      _
    // Predicated region
    $region6: #{tpu_custom_call.1} parent=1 // pred_check
      _
    $region7: #{tpu_custom_call.1} parent=1 // pred_check_branch
      %17 = sbr.rel (0) target = $region9
    $region8: #{tpu_custom_call.1} parent=1 // pred_region
      _
    $region9: #{tpu_custom_call.1} parent=1 // pred_fallthru
      _
    // Predicated region
    $region10: #{tpu_custom_call.1} parent=1 // pred_check
      _
    $region11: #{tpu_custom_call.1} parent=1 // pred_check_branch
      %19 = sbr.rel (0) target = $region13
    $region12: #{tpu_custom_call.1} parent=1 // pred_region
      _
    $region13: #{tpu_custom_call.1} parent=1 // pred_fallthru
      _
    // Predicated region
    $region14: #{tpu_custom_call.1} parent=1 // pred_check
      _
    $region15: #{tpu_custom_call.1} parent=1 // pred_check_branch
      %21 = sbr.rel (0) target = $region17
    $region16: #{tpu_custom_call.1} parent=1 // pred_region
      _
    $region17: #{tpu_custom_call.1} parent=1 // pred_fallthru
      _
    // Predicated region
    $region18: #{tpu_custom_call.1} parent=1 // pred_check
      _
    $region19: #{tpu_custom_call.1} parent=1 // pred_check_branch
      %23 = sbr.rel (0) target = $region21
    $region20: #{tpu_custom_call.1} parent=1 // pred_region
      _
    $region21: #{tpu_custom_call.1} parent=1 // pred_fallthru
      _
    // Predicated region
    $region22: #{tpu_custom_call.1} parent=1 // pred_check
      _
    $region23: #{tpu_custom_call.1} parent=1 // pred_check_branch
      %25 = sbr.rel (0) target = $region25
    $region24: #{tpu_custom_call.1} parent=1 // pred_region
      _
    $region25: #{tpu_custom_call.1} parent=1 // pred_fallthru
      _
    // Predicated region
    $region26: #{tpu_custom_call.1} parent=1 // pred_check
      _
    $region27: #{tpu_custom_call.1} parent=1 // pred_check_branch
      %27 = sbr.rel (0) target = $region29
    $region28: #{tpu_custom_call.1} parent=1 // pred_region
      _
    $region29: #{tpu_custom_call.1} parent=1 // pred_fallthru
      _
    // Predicated region
    $region30: #{tpu_custom_call.1} parent=1 // pred_check
      _
    $region31: #{tpu_custom_call.1} parent=1 // pred_check_branch
      %29 = sbr.rel (0) target = $region33
    $region32: #{tpu_custom_call.1} parent=1 // pred_region
      _
    $region33: #{tpu_custom_call.1} parent=1 // pred_fallthru
      _
    %v31 = vld [vmem:[%s1] sm:$0xf]
    %v32 = vld [vmem:[%s1 + $0x4] sm:$0xf]
    %v33 = vld [vmem:[%s1 + $0x8] sm:$0xf]
    %v34 = vld [vmem:[%s1 + $0xc] sm:$0xf]
    %v35 = vld [vmem:[%s1 + $0x10] sm:$0xf]
    %v36 = vld [vmem:[%s1 + $0x14] sm:$0xf]
    %v37 = vld [vmem:[%s1 + $0x18] sm:$0xf]
    %v38 = vld [vmem:[%s1 + $0x1c] sm:$0xf]
    %v39 = vld [vmem:[%s1 + $0x20] sm:$0xf]
    %v40 = vld [vmem:[%s1 + $0x24] sm:$0xf]
    %v41 = vld [vmem:[%s1 + $0x28] sm:$0xf]
    %v42 = vld [vmem:[%s1 + $0x2c] sm:$0xf]
    %v43 = vld [vmem:[%s1 + $0x30] sm:$0xf]
    %v44 = vld [vmem:[%s1 + $0x34] sm:$0xf]
    %v45 = vld [vmem:[%s1 + $0x38] sm:$0xf]
    %v46 = vld [vmem:[%s1 + $0x3c] sm:$0xf]
    %v47 = vld [vmem:[%s3] sm:$0xf]
    %v48 = vld [vmem:[%s3 + $0x4] sm:$0xf]
    %v49 = vld [vmem:[%s3 + $0x8] sm:$0xf]
    %v50 = vld [vmem:[%s3 + $0xc] sm:$0xf]
    %v51 = vld [vmem:[%s4] sm:$0x1]
    %v53 = vlaneseq
    %v54 = vshrl.u32 %v53, 7
    %v55 = vsub.s32 0, %v54
    %v56 = vrot.slane %v51, %v55
    %v74 = vunpack.c.l.b16 %v31
    %v75 = vunpack.c.l.b16 %v32
    %v76 = vunpack.c.l.b16 %v33
    %v77 = vunpack.c.l.b16 %v34
    %v78 = vunpack.c.l.b16 %v35
    %v79 = vunpack.c.l.b16 %v36
    %v80 = vunpack.c.l.b16 %v37
    %v81 = vunpack.c.l.b16 %v38
    %v82 = vunpack.c.l.b16 %v39
    %v83 = vunpack.c.l.b16 %v40
    %v84 = vunpack.c.l.b16 %v41
    %v85 = vunpack.c.l.b16 %v42
    %v86 = vunpack.c.l.b16 %v43
    %v87 = vunpack.c.l.b16 %v44
    %v88 = vunpack.c.l.b16 %v45
    %v89 = vunpack.c.l.b16 %v46
    %v90 = vpack.c.b16 %v75, %v74
    %v91 = vpack.c.b16 %v77, %v76
    %v92 = vpack.c.b16 %v79, %v78
    %v93 = vpack.c.b16 %v81, %v80
    %v94 = vpack.c.b16 %v83, %v82
    %v95 = vpack.c.b16 %v85, %v84
    %v96 = vpack.c.b16 %v87, %v86
    %v97 = vpack.c.b16 %v89, %v88
    %v102 = vunpack.c.l.b16 %v47
    %v103 = vunpack.c.l.b16 %v48
    %v104 = vunpack.c.l.b16 %v49
    %v105 = vunpack.c.l.b16 %v50
    %v106 = vpack.c.b16 %v103, %v102
    %v107 = vpack.c.b16 %v105, %v104
    %vm110 = vcmask 261120
    %v112 = vsel %vm110, %v90, 0
    %v115 = vsel %vm110, %v91, 0
    %v118 = vsel %vm110, %v92, 0
    %v121 = vsel %vm110, %v93, 0
    %v124 = vsel %vm110, %v94, 0
    %v127 = vsel %vm110, %v95, 0
    %v130 = vsel %vm110, %v96, 0
    %v133 = vsel %vm110, %v97, 0
    %135 = vmatprep.subr.bf16.mxu0 0
    %136 = vmatpush1.bf16.msra.mxu0 0
    %137 = vmatprep.subr.bf16.mxu0 0
    %138 = vmatpush1.bf16.msra.mxu0 0
    %139 = vmatprep.subr.bf16.mxu0 0
    %140 = vmatpush1.bf16.msra.mxu0 0
    %141 = vmatprep.subr.bf16.mxu0 0
    %142 = vmatpush1.bf16.msra.mxu0 0
    %143 = vmatprep.subr.bf16.mxu0 0
    %144 = vmatpush1.bf16.msra.mxu0 0
    %145 = vmatprep.subr.bf16.mxu0 0
    %146 = vmatpush1.bf16.msra.mxu0 0
    %147 = vmatprep.subr.bf16.mxu0 0
    %148 = vmatpush1.bf16.msra.mxu0 %v107
    %149 = vmatprep.subr.bf16.mxu0 0
    %150 = vmatpush1.bf16.msra.mxu0 %v106
    %151 = vmatprep.subr.bf16.mxu0 0
    %152 = vmatpush2.bf16.msra.mxu0 0
    %153 = vmatprep.subr.bf16.mxu0 0
    %154 = vmatpush2.bf16.msra.mxu0 0
    %155 = vmatprep.subr.bf16.mxu0 0
    %156 = vmatpush2.bf16.msra.mxu0 0
    %157 = vmatprep.subr.bf16.mxu0 0
    %158 = vmatpush2.bf16.msra.mxu0 0
    %159 = vmatprep.subr.bf16.mxu0 0
    %160 = vmatpush2.bf16.msra.mxu0 0
    %161 = vmatprep.subr.bf16.mxu0 0
    %162 = vmatpush2.bf16.msra.mxu0 0
    %163 = vmatprep.subr.bf16.mxu0 0
    %164 = vmatpush2.bf16.msra.mxu0 0
    %165 = vmatprep.subr.bf16.mxu0 0
    %166 = vmatpush2.bf16.msra.mxu0 0
    %167 = vmatprep.mubr.bf16.mxu0 0
    %168 = vmatmul.mubr.bf16.gmra.mxu0 %v112
    %v169 = vpop.f32.mrf.mxu0
    %v170 = vadd.f32 %v56, %v169
    %v171 = vpop.f32.mrf.mxu0
    %v172 = vpop.f32.mrf.mxu0
    %v173 = vadd.f32 %v56, %v172
    %v174 = vpop.f32.mrf.mxu0
    %175 = vmatprep.mubr.bf16.mxu0 0
    %176 = vmatmul.mubr.bf16.gmra.mxu0 %v115
    %v177 = vpop.f32.mrf.mxu0
    %v178 = vadd.f32 %v56, %v177
    %v179 = vpop.f32.mrf.mxu0
    %v180 = vpop.f32.mrf.mxu0
    %v181 = vadd.f32 %v56, %v180
    %v182 = vpop.f32.mrf.mxu0
    %183 = vmatprep.mubr.bf16.mxu0 0
    %184 = vmatmul.mubr.bf16.gmra.mxu0 %v118
    %v185 = vpop.f32.mrf.mxu0
    %v186 = vadd.f32 %v56, %v185
    %v187 = vpop.f32.mrf.mxu0
    %v188 = vpop.f32.mrf.mxu0
    %v189 = vadd.f32 %v56, %v188
    %v190 = vpop.f32.mrf.mxu0
    %191 = vmatprep.mubr.bf16.mxu0 0
    %192 = vmatmul.mubr.bf16.gmra.mxu0 %v121
    %v193 = vpop.f32.mrf.mxu0
    %v194 = vadd.f32 %v56, %v193
    %v195 = vpop.f32.mrf.mxu0
    %v196 = vpop.f32.mrf.mxu0
    %v197 = vadd.f32 %v56, %v196
    %v198 = vpop.f32.mrf.mxu0
    %199 = vmatprep.mubr.bf16.mxu0 0
    %200 = vmatmul.mubr.bf16.gmra.mxu0 %v124
    %v201 = vpop.f32.mrf.mxu0
    %v202 = vadd.f32 %v56, %v201
    %v203 = vpop.f32.mrf.mxu0
    %v204 = vpop.f32.mrf.mxu0
    %v205 = vadd.f32 %v56, %v204
    %v206 = vpop.f32.mrf.mxu0
    %207 = vmatprep.mubr.bf16.mxu0 0
    %208 = vmatmul.mubr.bf16.gmra.mxu0 %v127
    %v209 = vpop.f32.mrf.mxu0
    %v210 = vadd.f32 %v56, %v209
    %v211 = vpop.f32.mrf.mxu0
    %v212 = vpop.f32.mrf.mxu0
    %v213 = vadd.f32 %v56, %v212
    %v214 = vpop.f32.mrf.mxu0
    %215 = vmatprep.mubr.bf16.mxu0 0
    %216 = vmatmul.mubr.bf16.gmra.mxu0 %v130
    %v217 = vpop.f32.mrf.mxu0
    %v218 = vadd.f32 %v56, %v217
    %v219 = vpop.f32.mrf.mxu0
    %v220 = vpop.f32.mrf.mxu0
    %v221 = vadd.f32 %v56, %v220
    %v222 = vpop.f32.mrf.mxu0
    %223 = vmatprep.mubr.bf16.mxu0 0
    %224 = vmatmul.mubr.bf16.gmra.mxu0 %v133
    %v225 = vpop.f32.mrf.mxu0
    %v226 = vadd.f32 %v56, %v225
    %v227 = vpop.f32.mrf.mxu0
    %v228 = vpop.f32.mrf.mxu0
    %v229 = vadd.f32 %v56, %v228
    %v230 = vpop.f32.mrf.mxu0
    %231 = vdwg.mxu0
    %v232 = vmax.f32 %v170, 0.0
    %v233 = vmax.f32 %v173, 0.0
    %v234 = vmax.f32 %v178, 0.0
    %v235 = vmax.f32 %v181, 0.0
    %v236 = vmax.f32 %v186, 0.0
    %v237 = vmax.f32 %v189, 0.0
    %v238 = vmax.f32 %v194, 0.0
    %v239 = vmax.f32 %v197, 0.0
    %v240 = vmax.f32 %v202, 0.0
    %v241 = vmax.f32 %v205, 0.0
    %v242 = vmax.f32 %v210, 0.0
    %v243 = vmax.f32 %v213, 0.0
    %v244 = vmax.f32 %v218, 0.0
    %v245 = vmax.f32 %v221, 0.0
    %v246 = vmax.f32 %v226, 0.0
    %v247 = vmax.f32 %v229, 0.0
    %v248 = vld [vmem:[%s2] sm:$0xff]
    %v249 = vld [vmem:[%s2 + $0x8] sm:$0xff]
    %v250 = vld [vmem:[%s2 + $0x10] sm:$0xff]
    %v251 = vld [vmem:[%s2 + $0x18] sm:$0xff]
    %v252 = vld [vmem:[%s2 + $0x20] sm:$0xff]
    %v253 = vld [vmem:[%s2 + $0x28] sm:$0xff]
    %v254 = vld [vmem:[%s2 + $0x30] sm:$0xff]
    %v255 = vld [vmem:[%s2 + $0x38] sm:$0xff]
    %v256 = vld [vmem:[%s2 + $0x40] sm:$0xff]
    %v257 = vld [vmem:[%s2 + $0x48] sm:$0xff]
    %v258 = vld [vmem:[%s2 + $0x50] sm:$0xff]
    %v259 = vld [vmem:[%s2 + $0x58] sm:$0xff]
    %v260 = vld [vmem:[%s2 + $0x60] sm:$0xff]
    %v261 = vld [vmem:[%s2 + $0x68] sm:$0xff]
    %v262 = vld [vmem:[%s2 + $0x70] sm:$0xff]
    %v263 = vld [vmem:[%s2 + $0x78] sm:$0xff]
    %265 = vset.pattern.permute.xlu0 0
    %266 = vperm.xlu0 %265, %v248
    %v267 = vpop.permute.xlu0 %266
    %270 = vset.pattern.permute.xlu0 0
    %271 = vperm.xlu0 %270, %v249
    %v272 = vpop.permute.xlu0 %271
    %275 = vset.pattern.permute.xlu0 0
    %276 = vperm.xlu0 %275, %v250
    %v277 = vpop.permute.xlu0 %276
    %280 = vset.pattern.permute.xlu0 0
    %281 = vperm.xlu0 %280, %v251
    %v282 = vpop.permute.xlu0 %281
    %285 = vset.pattern.permute.xlu0 0
    %286 = vperm.xlu0 %285, %v252
    %v287 = vpop.permute.xlu0 %286
    %290 = vset.pattern.permute.xlu0 0
    %291 = vperm.xlu0 %290, %v253
    %v292 = vpop.permute.xlu0 %291
    %295 = vset.pattern.permute.xlu0 0
    %296 = vperm.xlu0 %295, %v254
    %v297 = vpop.permute.xlu0 %296
    %300 = vset.pattern.permute.xlu0 0
    %301 = vperm.xlu0 %300, %v255
    %v302 = vpop.permute.xlu0 %301
    %305 = vset.pattern.permute.xlu0 0
    %306 = vperm.xlu0 %305, %v256
    %v307 = vpop.permute.xlu0 %306
    %310 = vset.pattern.permute.xlu0 0
    %311 = vperm.xlu0 %310, %v257
    %v312 = vpop.permute.xlu0 %311
    %315 = vset.pattern.permute.xlu0 0
    %316 = vperm.xlu0 %315, %v258
    %v317 = vpop.permute.xlu0 %316
    %320 = vset.pattern.permute.xlu0 0
    %321 = vperm.xlu0 %320, %v259
    %v322 = vpop.permute.xlu0 %321
    %325 = vset.pattern.permute.xlu0 0
    %326 = vperm.xlu0 %325, %v260
    %v327 = vpop.permute.xlu0 %326
    %330 = vset.pattern.permute.xlu0 0
    %331 = vperm.xlu0 %330, %v261
    %v332 = vpop.permute.xlu0 %331
    %335 = vset.pattern.permute.xlu0 0
    %336 = vperm.xlu0 %335, %v262
    %v337 = vpop.permute.xlu0 %336
    %340 = vset.pattern.permute.xlu0 0
    %341 = vperm.xlu0 %340, %v263
    %v342 = vpop.permute.xlu0 %341
    %v344 = vmul.f32 %v267, %v232
    %v345 = vmul.f32 %v272, %v233
    %v346 = vmul.f32 %v277, %v234
    %v347 = vmul.f32 %v282, %v235
    %v348 = vmul.f32 %v287, %v236
    %v349 = vmul.f32 %v292, %v237
    %v350 = vmul.f32 %v297, %v238
    %v351 = vmul.f32 %v302, %v239
    %v352 = vmul.f32 %v307, %v240
    %v353 = vmul.f32 %v312, %v241
    %v354 = vmul.f32 %v317, %v242
    %v355 = vmul.f32 %v322, %v243
    %v356 = vmul.f32 %v327, %v244
    %v357 = vmul.f32 %v332, %v245
    %v358 = vmul.f32 %v337, %v246
    %v359 = vmul.f32 %v342, %v247
    %v360 = vrot.slane %v344, 4
    %v361 = vadd.f32 %v344, %v360
    %v362 = vrot.slane %v361, 2
    %v363 = vadd.f32 %v361, %v362
    %v364 = vrot.slane %v363, 1
    %v365 = vadd.f32 %v363, %v364
    %v366 = vrot.slane %v345, 4
    %v367 = vadd.f32 %v345, %v366
    %v368 = vrot.slane %v367, 2
    %v369 = vadd.f32 %v367, %v368
    %v370 = vrot.slane %v369, 1
    %v371 = vadd.f32 %v369, %v370
    %v372 = vrot.slane %v346, 4
    %v373 = vadd.f32 %v346, %v372
    %v374 = vrot.slane %v373, 2
    %v375 = vadd.f32 %v373, %v374
    %v376 = vrot.slane %v375, 1
    %v377 = vadd.f32 %v375, %v376
    %v378 = vrot.slane %v347, 4
    %v379 = vadd.f32 %v347, %v378
    %v380 = vrot.slane %v379, 2
    %v381 = vadd.f32 %v379, %v380
    %v382 = vrot.slane %v381, 1
    %v383 = vadd.f32 %v381, %v382
    %v384 = vrot.slane %v348, 4
    %v385 = vadd.f32 %v348, %v384
    %v386 = vrot.slane %v385, 2
    %v387 = vadd.f32 %v385, %v386
    %v388 = vrot.slane %v387, 1
    %v389 = vadd.f32 %v387, %v388
    %v390 = vrot.slane %v349, 4
    %v391 = vadd.f32 %v349, %v390
    %v392 = vrot.slane %v391, 2
    %v393 = vadd.f32 %v391, %v392
    %v394 = vrot.slane %v393, 1
    %v395 = vadd.f32 %v393, %v394
    %v396 = vrot.slane %v350, 4
    %v397 = vadd.f32 %v350, %v396
    %v398 = vrot.slane %v397, 2
    %v399 = vadd.f32 %v397, %v398
    %v400 = vrot.slane %v399, 1
    %v401 = vadd.f32 %v399, %v400
    %v402 = vrot.slane %v351, 4
    %v403 = vadd.f32 %v351, %v402
    %v404 = vrot.slane %v403, 2
    %v405 = vadd.f32 %v403, %v404
    %v406 = vrot.slane %v405, 1
    %v407 = vadd.f32 %v405, %v406
    %v408 = vrot.slane %v352, 4
    %v409 = vadd.f32 %v352, %v408
    %v410 = vrot.slane %v409, 2
    %v411 = vadd.f32 %v409, %v410
    %v412 = vrot.slane %v411, 1
    %v413 = vadd.f32 %v411, %v412
    %v414 = vrot.slane %v353, 4
    %v415 = vadd.f32 %v353, %v414
    %v416 = vrot.slane %v415, 2
    %v417 = vadd.f32 %v415, %v416
    %v418 = vrot.slane %v417, 1
    %v419 = vadd.f32 %v417, %v418
    %v420 = vrot.slane %v354, 4
    %v421 = vadd.f32 %v354, %v420
    %v422 = vrot.slane %v421, 2
    %v423 = vadd.f32 %v421, %v422
    %v424 = vrot.slane %v423, 1
    %v425 = vadd.f32 %v423, %v424
    %v426 = vrot.slane %v355, 4
    %v427 = vadd.f32 %v355, %v426
    %v428 = vrot.slane %v427, 2
    %v429 = vadd.f32 %v427, %v428
    %v430 = vrot.slane %v429, 1
    %v431 = vadd.f32 %v429, %v430
    %v432 = vrot.slane %v356, 4
    %v433 = vadd.f32 %v356, %v432
    %v434 = vrot.slane %v433, 2
    %v435 = vadd.f32 %v433, %v434
    %v436 = vrot.slane %v435, 1
    %v437 = vadd.f32 %v435, %v436
    %v438 = vrot.slane %v357, 4
    %v439 = vadd.f32 %v357, %v438
    %v440 = vrot.slane %v439, 2
    %v441 = vadd.f32 %v439, %v440
    %v442 = vrot.slane %v441, 1
    %v443 = vadd.f32 %v441, %v442
    %v444 = vrot.slane %v358, 4
    %v445 = vadd.f32 %v358, %v444
    %v446 = vrot.slane %v445, 2
    %v447 = vadd.f32 %v445, %v446
    %v448 = vrot.slane %v447, 1
    %v449 = vadd.f32 %v447, %v448
    %v450 = vrot.slane %v359, 4
    %v451 = vadd.f32 %v359, %v450
    %v452 = vrot.slane %v451, 2
    %v453 = vadd.f32 %v451, %v452
    %v454 = vrot.slane %v453, 1
    %v455 = vadd.f32 %v453, %v454
    %vm456 = vcmask 7168
    %v457 = vsel %vm456, %v248, 0.0
    %v458 = vrot.slane %v457, 4
    %v459 = vadd.f32 %v457, %v458
    %v460 = vrot.slane %v459, 2
    %v461 = vadd.f32 %v459, %v460
    %v462 = vrot.slane %v461, 1
    %v463 = vadd.f32 %v461, %v462
    %v464 = vsel %vm456, %v249, 0.0
    %v465 = vrot.slane %v464, 4
    %v466 = vadd.f32 %v464, %v465
    %v467 = vrot.slane %v466, 2
    %v468 = vadd.f32 %v466, %v467
    %v469 = vrot.slane %v468, 1
    %v470 = vadd.f32 %v468, %v469
    %v471 = vsel %vm456, %v250, 0.0
    %v472 = vrot.slane %v471, 4
    %v473 = vadd.f32 %v471, %v472
    %v474 = vrot.slane %v473, 2
    %v475 = vadd.f32 %v473, %v474
    %v476 = vrot.slane %v475, 1
    %v477 = vadd.f32 %v475, %v476
    %v478 = vsel %vm456, %v251, 0.0
    %v479 = vrot.slane %v478, 4
    %v480 = vadd.f32 %v478, %v479
    %v481 = vrot.slane %v480, 2
    %v482 = vadd.f32 %v480, %v481
    %v483 = vrot.slane %v482, 1
    %v484 = vadd.f32 %v482, %v483
    %v485 = vsel %vm456, %v252, 0.0
    %v486 = vrot.slane %v485, 4
    %v487 = vadd.f32 %v485, %v486
    %v488 = vrot.slane %v487, 2
    %v489 = vadd.f32 %v487, %v488
    %v490 = vrot.slane %v489, 1
    %v491 = vadd.f32 %v489, %v490
    %v492 = vsel %vm456, %v253, 0.0
    %v493 = vrot.slane %v492, 4
    %v494 = vadd.f32 %v492, %v493
    %v495 = vrot.slane %v494, 2
    %v496 = vadd.f32 %v494, %v495
    %v497 = vrot.slane %v496, 1
    %v498 = vadd.f32 %v496, %v497
    %v499 = vsel %vm456, %v254, 0.0
    %v500 = vrot.slane %v499, 4
    %v501 = vadd.f32 %v499, %v500
    %v502 = vrot.slane %v501, 2
    %v503 = vadd.f32 %v501, %v502
    %v504 = vrot.slane %v503, 1
    %v505 = vadd.f32 %v503, %v504
    %v506 = vsel %vm456, %v255, 0.0
    %v507 = vrot.slane %v506, 4
    %v508 = vadd.f32 %v506, %v507
    %v509 = vrot.slane %v508, 2
    %v510 = vadd.f32 %v508, %v509
    %v511 = vrot.slane %v510, 1
    %v512 = vadd.f32 %v510, %v511
    %v513 = vsel %vm456, %v256, 0.0
    %v514 = vrot.slane %v513, 4
    %v515 = vadd.f32 %v513, %v514
    %v516 = vrot.slane %v515, 2
    %v517 = vadd.f32 %v515, %v516
    %v518 = vrot.slane %v517, 1
    %v519 = vadd.f32 %v517, %v518
    %v520 = vsel %vm456, %v257, 0.0
    %v521 = vrot.slane %v520, 4
    %v522 = vadd.f32 %v520, %v521
    %v523 = vrot.slane %v522, 2
    %v524 = vadd.f32 %v522, %v523
    %v525 = vrot.slane %v524, 1
    %v526 = vadd.f32 %v524, %v525
    %v527 = vsel %vm456, %v258, 0.0
    %v528 = vrot.slane %v527, 4
    %v529 = vadd.f32 %v527, %v528
    %v530 = vrot.slane %v529, 2
    %v531 = vadd.f32 %v529, %v530
    %v532 = vrot.slane %v531, 1
    %v533 = vadd.f32 %v531, %v532
    %v534 = vsel %vm456, %v259, 0.0
    %v535 = vrot.slane %v534, 4
    %v536 = vadd.f32 %v534, %v535
    %v537 = vrot.slane %v536, 2
    %v538 = vadd.f32 %v536, %v537
    %v539 = vrot.slane %v538, 1
    %v540 = vadd.f32 %v538, %v539
    %v541 = vsel %vm456, %v260, 0.0
    %v542 = vrot.slane %v541, 4
    %v543 = vadd.f32 %v541, %v542
    %v544 = vrot.slane %v543, 2
    %v545 = vadd.f32 %v543, %v544
    %v546 = vrot.slane %v545, 1
    %v547 = vadd.f32 %v545, %v546
    %v548 = vsel %vm456, %v261, 0.0
    %v549 = vrot.slane %v548, 4
    %v550 = vadd.f32 %v548, %v549
    %v551 = vrot.slane %v550, 2
    %v552 = vadd.f32 %v550, %v551
    %v553 = vrot.slane %v552, 1
    %v554 = vadd.f32 %v552, %v553
    %v555 = vsel %vm456, %v262, 0.0
    %v556 = vrot.slane %v555, 4
    %v557 = vadd.f32 %v555, %v556
    %v558 = vrot.slane %v557, 2
    %v559 = vadd.f32 %v557, %v558
    %v560 = vrot.slane %v559, 1
    %v561 = vadd.f32 %v559, %v560
    %v562 = vsel %vm456, %v263, 0.0
    %v563 = vrot.slane %v562, 4
    %v564 = vadd.f32 %v562, %v563
    %v565 = vrot.slane %v564, 2
    %v566 = vadd.f32 %v564, %v565
    %v567 = vrot.slane %v566, 1
    %v568 = vadd.f32 %v566, %v567
    %v569 = vmax.f32 %v463, 1e-12
    %v570 = vmax.f32 %v470, 1e-12
    %v571 = vmax.f32 %v477, 1e-12
    %v572 = vmax.f32 %v484, 1e-12
    %v573 = vmax.f32 %v491, 1e-12
    %v574 = vmax.f32 %v498, 1e-12
    %v575 = vmax.f32 %v505, 1e-12
    %v576 = vmax.f32 %v512, 1e-12
    %v577 = vmax.f32 %v519, 1e-12
    %v578 = vmax.f32 %v526, 1e-12
    %v579 = vmax.f32 %v533, 1e-12
    %v580 = vmax.f32 %v540, 1e-12
    %v581 = vmax.f32 %v547, 1e-12
    %v582 = vmax.f32 %v554, 1e-12
    %v583 = vmax.f32 %v561, 1e-12
    %v584 = vmax.f32 %v568, 1e-12
    %v585 = vrcp.pop %v569
    %v586 = vrcp.pop %v570
    %v587 = vrcp.pop %v571
    %v588 = vrcp.pop %v572
    %v589 = vrcp.pop %v573
    %v590 = vrcp.pop %v574
    %v591 = vrcp.pop %v575
    %v592 = vrcp.pop %v576
    %v593 = vrcp.pop %v577
    %v594 = vrcp.pop %v578
    %v595 = vrcp.pop %v579
    %v596 = vrcp.pop %v580
    %v597 = vrcp.pop %v581
    %v598 = vrcp.pop %v582
    %v599 = vrcp.pop %v583
    %v600 = vrcp.pop %v584
    %602 = vset.pattern.permute.xlu0 0
    %603 = vperm.xlu0 %602, %v585
    %v604 = vpop.permute.xlu0 %603
    %607 = vset.pattern.permute.xlu0 0
    %608 = vperm.xlu0 %607, %v586
    %v609 = vpop.permute.xlu0 %608
    %612 = vset.pattern.permute.xlu0 0
    %613 = vperm.xlu0 %612, %v587
    %v614 = vpop.permute.xlu0 %613
    %617 = vset.pattern.permute.xlu0 0
    %618 = vperm.xlu0 %617, %v588
    %v619 = vpop.permute.xlu0 %618
    %622 = vset.pattern.permute.xlu0 0
    %623 = vperm.xlu0 %622, %v589
    %v624 = vpop.permute.xlu0 %623
    %627 = vset.pattern.permute.xlu0 0
    %628 = vperm.xlu0 %627, %v590
    %v629 = vpop.permute.xlu0 %628
    %632 = vset.pattern.permute.xlu0 0
    %633 = vperm.xlu0 %632, %v591
    %v634 = vpop.permute.xlu0 %633
    %637 = vset.pattern.permute.xlu0 0
    %638 = vperm.xlu0 %637, %v592
    %v639 = vpop.permute.xlu0 %638
    %642 = vset.pattern.permute.xlu0 0
    %643 = vperm.xlu0 %642, %v593
    %v644 = vpop.permute.xlu0 %643
    %647 = vset.pattern.permute.xlu0 0
    %648 = vperm.xlu0 %647, %v594
    %v649 = vpop.permute.xlu0 %648
    %652 = vset.pattern.permute.xlu0 0
    %653 = vperm.xlu0 %652, %v595
    %v654 = vpop.permute.xlu0 %653
    %657 = vset.pattern.permute.xlu0 0
    %658 = vperm.xlu0 %657, %v596
    %v659 = vpop.permute.xlu0 %658
    %662 = vset.pattern.permute.xlu0 0
    %663 = vperm.xlu0 %662, %v597
    %v664 = vpop.permute.xlu0 %663
    %667 = vset.pattern.permute.xlu0 0
    %668 = vperm.xlu0 %667, %v598
    %v669 = vpop.permute.xlu0 %668
    %672 = vset.pattern.permute.xlu0 0
    %673 = vperm.xlu0 %672, %v599
    %v674 = vpop.permute.xlu0 %673
    %677 = vset.pattern.permute.xlu0 0
    %678 = vperm.xlu0 %677, %v600
    %v679 = vpop.permute.xlu0 %678
    %v681 = vmul.f32 %v365, %v604
    %v682 = vmul.f32 %v371, %v609
    %v683 = vmul.f32 %v377, %v614
    %v684 = vmul.f32 %v383, %v619
    %v685 = vmul.f32 %v389, %v624
    %v686 = vmul.f32 %v395, %v629
    %v687 = vmul.f32 %v401, %v634
    %v688 = vmul.f32 %v407, %v639
    %v689 = vmul.f32 %v413, %v644
    %v690 = vmul.f32 %v419, %v649
    %v691 = vmul.f32 %v425, %v654
    %v692 = vmul.f32 %v431, %v659
    %v693 = vmul.f32 %v437, %v664
    %v694 = vmul.f32 %v443, %v669
    %v695 = vmul.f32 %v449, %v674
    %v696 = vmul.f32 %v455, %v679
    %v697 = vld [vmem:[%s0] sm:$0xf]
    %v698 = vld [vmem:[%s0 + $0x4] sm:$0xf]
    %v699 = vld [vmem:[%s5] sm:$0xf]
    %v700 = vld [vmem:[%s5 + $0x4] sm:$0xf]
    %v701 = vld [vmem:[%s5 + $0x8] sm:$0xf]
    %v702 = vld [vmem:[%s5 + $0xc] sm:$0xf]
    %v703 = vpack.c.bf16 %v681, %v681
    %v704 = vpack.c.bf16 %v682, %v682
    %v705 = vpack.c.bf16 %v683, %v683
    %v706 = vpack.c.bf16 %v684, %v684
    %v707 = vpack.c.bf16 %v685, %v685
    %v708 = vpack.c.bf16 %v686, %v686
    %v709 = vpack.c.bf16 %v687, %v687
    %v710 = vpack.c.bf16 %v688, %v688
    %v711 = vpack.c.bf16 %v689, %v689
    %v712 = vpack.c.bf16 %v690, %v690
    %v713 = vpack.c.bf16 %v691, %v691
    %v714 = vpack.c.bf16 %v692, %v692
    %v715 = vpack.c.bf16 %v693, %v693
    %v716 = vpack.c.bf16 %v694, %v694
    %v717 = vpack.c.bf16 %v695, %v695
    %v718 = vpack.c.bf16 %v696, %v696
    %v719 = vld [vmem:[%s6] sm:$0xf]
    %v720 = vld [vmem:[%s6 + $0x4] sm:$0xf]
    %v721 = vld [vmem:[%s6 + $0x8] sm:$0xf]
    %v722 = vld [vmem:[%s6 + $0xc] sm:$0xf]
    %v723 = vld [vmem:[%s6 + $0x10] sm:$0xf]
    %v724 = vld [vmem:[%s6 + $0x14] sm:$0xf]
    %v725 = vld [vmem:[%s6 + $0x18] sm:$0xf]
    %v726 = vld [vmem:[%s6 + $0x1c] sm:$0xf]
    %v727 = vld [vmem:[%s6 + $0x20] sm:$0xf]
    %v728 = vld [vmem:[%s6 + $0x24] sm:$0xf]
    %v729 = vld [vmem:[%s6 + $0x28] sm:$0xf]
    %v730 = vld [vmem:[%s6 + $0x2c] sm:$0xf]
    %v731 = vld [vmem:[%s6 + $0x30] sm:$0xf]
    %v732 = vld [vmem:[%s6 + $0x34] sm:$0xf]
    %v733 = vld [vmem:[%s6 + $0x38] sm:$0xf]
    %v734 = vld [vmem:[%s6 + $0x3c] sm:$0xf]
    %v751 = vunpack.c.l.b16 %v703
    %v752 = vunpack.c.l.b16 %v704
    %v753 = vunpack.c.l.b16 %v705
    %v754 = vunpack.c.l.b16 %v706
    %v755 = vunpack.c.l.b16 %v707
    %v756 = vunpack.c.l.b16 %v708
    %v757 = vunpack.c.l.b16 %v709
    %v758 = vunpack.c.l.b16 %v710
    %v759 = vunpack.c.l.b16 %v711
    %v760 = vunpack.c.l.b16 %v712
    %v761 = vunpack.c.l.b16 %v713
    %v762 = vunpack.c.l.b16 %v714
    %v763 = vunpack.c.l.b16 %v715
    %v764 = vunpack.c.l.b16 %v716
    %v765 = vunpack.c.l.b16 %v717
    %v766 = vunpack.c.l.b16 %v718
    %vm767 = vcmask 1041409
    %v768 = vsel %vm767, %v752, %v751
    %vm769 = vcmask 1042434
    %v770 = vsel %vm769, %v753, %v768
    %vm771 = vcmask 1043459
    %v772 = vsel %vm771, %v754, %v770
    %vm773 = vcmask 1044484
    %v774 = vsel %vm773, %v755, %v772
    %vm775 = vcmask 1045509
    %v776 = vsel %vm775, %v756, %v774
    %vm777 = vcmask 1046534
    %v778 = vsel %vm777, %v757, %v776
    %vm779 = vcmask 1047559
    %v780 = vsel %vm779, %v758, %v778
    %v781 = vsel %vm767, %v760, %v759
    %v782 = vsel %vm769, %v761, %v781
    %v783 = vsel %vm771, %v762, %v782
    %v784 = vsel %vm773, %v763, %v783
    %v785 = vsel %vm775, %v764, %v784
    %v786 = vsel %vm777, %v765, %v785
    %v787 = vsel %vm779, %v766, %v786
    %v788 = vpack.c.b16 %v787, %v780
    %v806 = vunpack.c.l.b16 %v719
    %v807 = vunpack.c.l.b16 %v720
    %v808 = vunpack.c.l.b16 %v721
    %v809 = vunpack.c.l.b16 %v722
    %v810 = vunpack.c.l.b16 %v723
    %v811 = vunpack.c.l.b16 %v724
    %v812 = vunpack.c.l.b16 %v725
    %v813 = vunpack.c.l.b16 %v726
    %v814 = vunpack.c.l.b16 %v727
    %v815 = vunpack.c.l.b16 %v728
    %v816 = vunpack.c.l.b16 %v729
    %v817 = vunpack.c.l.b16 %v730
    %v818 = vunpack.c.l.b16 %v731
    %v819 = vunpack.c.l.b16 %v732
    %v820 = vunpack.c.l.b16 %v733
    %v821 = vunpack.c.l.b16 %v734
    %v822 = vpack.c.b16 %v807, %v806
    %v823 = vpack.c.b16 %v809, %v808
    %v824 = vpack.c.b16 %v811, %v810
    %v825 = vpack.c.b16 %v813, %v812
    %v826 = vpack.c.b16 %v815, %v814
    %v827 = vpack.c.b16 %v817, %v816
    %v828 = vpack.c.b16 %v819, %v818
    %v829 = vpack.c.b16 %v821, %v820
    %838 = vmatprep.subr.bf16.mxu0 0
    %839 = vmatpush1.bf16.msra.mxu0 %v829
    %840 = vmatprep.subr.bf16.mxu0 0
    %841 = vmatpush1.bf16.msra.mxu0 %v828
    %842 = vmatprep.subr.bf16.mxu0 0
    %843 = vmatpush1.bf16.msra.mxu0 %v827
    %844 = vmatprep.subr.bf16.mxu0 0
    %845 = vmatpush1.bf16.msra.mxu0 %v826
    %846 = vmatprep.subr.bf16.mxu0 0
    %847 = vmatpush1.bf16.msra.mxu0 %v825
    %848 = vmatprep.subr.bf16.mxu0 0
    %849 = vmatpush1.bf16.msra.mxu0 %v824
    %850 = vmatprep.subr.bf16.mxu0 0
    %851 = vmatpush1.bf16.msra.mxu0 %v823
    %852 = vmatprep.subr.bf16.mxu0 0
    %853 = vmatpush1.bf16.msra.mxu0 %v822
    %854 = vmatprep.subr.bf16.mxu0 0
    %855 = vmatpush2.bf16.msra.mxu0 0
    %856 = vmatprep.subr.bf16.mxu0 0
    %857 = vmatpush2.bf16.msra.mxu0 0
    %858 = vmatprep.subr.bf16.mxu0 0
    %859 = vmatpush2.bf16.msra.mxu0 0
    %860 = vmatprep.subr.bf16.mxu0 0
    %861 = vmatpush2.bf16.msra.mxu0 0
    %862 = vmatprep.subr.bf16.mxu0 0
    %863 = vmatpush2.bf16.msra.mxu0 0
    %864 = vmatprep.subr.bf16.mxu0 0
    %865 = vmatpush2.bf16.msra.mxu0 0
    %866 = vmatprep.subr.bf16.mxu0 0
    %867 = vmatpush2.bf16.msra.mxu0 0
    %868 = vmatprep.subr.bf16.mxu0 0
    %869 = vmatpush2.bf16.msra.mxu0 0
    %870 = vmatprep.mubr.bf16.mxu0 0
    %871 = vmatmul.mubr.bf16.gmra.mxu0 %v788
    %v872 = vpop.f32.mrf.mxu0
    %v873 = vadd.f32 0.0, %v872
    %v874 = vpop.f32.mrf.mxu0
    %v875 = vpop.f32.mrf.mxu0
    %v876 = vadd.f32 0.0, %v875
    %v877 = vpop.f32.mrf.mxu0
    %878 = vdwg.mxu0
    %v881 = vunpack.c.l.b16 %v697
    %v882 = vunpack.c.l.b16 %v698
    %v883 = vpack.c.b16 %v882, %v881
    %v888 = vunpack.c.l.b16 %v699
    %v889 = vunpack.c.l.b16 %v700
    %v890 = vunpack.c.l.b16 %v701
    %v891 = vunpack.c.l.b16 %v702
    %v892 = vpack.c.b16 %v889, %v888
    %v893 = vpack.c.b16 %v891, %v890
    %v897 = vsel %vm110, %v883, 0
    %899 = vmatprep.subr.bf16.mxu0 0
    %900 = vmatpush1.bf16.msra.mxu0 0
    %901 = vmatprep.subr.bf16.mxu0 0
    %902 = vmatpush1.bf16.msra.mxu0 0
    %903 = vmatprep.subr.bf16.mxu0 0
    %904 = vmatpush1.bf16.msra.mxu0 0
    %905 = vmatprep.subr.bf16.mxu0 0
    %906 = vmatpush1.bf16.msra.mxu0 0
    %907 = vmatprep.subr.bf16.mxu0 0
    %908 = vmatpush1.bf16.msra.mxu0 0
    %909 = vmatprep.subr.bf16.mxu0 0
    %910 = vmatpush1.bf16.msra.mxu0 0
    %911 = vmatprep.subr.bf16.mxu0 0
    %912 = vmatpush1.bf16.msra.mxu0 %v893
    %913 = vmatprep.subr.bf16.mxu0 0
    %914 = vmatpush1.bf16.msra.mxu0 %v892
    %915 = vmatprep.subr.bf16.mxu0 0
    %916 = vmatpush2.bf16.msra.mxu0 0
    %917 = vmatprep.subr.bf16.mxu0 0
    %918 = vmatpush2.bf16.msra.mxu0 0
    %919 = vmatprep.subr.bf16.mxu0 0
    %920 = vmatpush2.bf16.msra.mxu0 0
    %921 = vmatprep.subr.bf16.mxu0 0
    %922 = vmatpush2.bf16.msra.mxu0 0
    %923 = vmatprep.subr.bf16.mxu0 0
    %924 = vmatpush2.bf16.msra.mxu0 0
    %925 = vmatprep.subr.bf16.mxu0 0
    %926 = vmatpush2.bf16.msra.mxu0 0
    %927 = vmatprep.subr.bf16.mxu0 0
    %928 = vmatpush2.bf16.msra.mxu0 0
    %929 = vmatprep.subr.bf16.mxu0 0
    %930 = vmatpush2.bf16.msra.mxu0 0
    %931 = vmatprep.mubr.bf16.mxu0 0
    %932 = vmatmul.mubr.bf16.gmra.mxu0 %v897
    %v933 = vpop.f32.mrf.mxu0
    %v934 = vadd.f32 %v873, %v933
    %v935 = vpop.f32.mrf.mxu0
    %v936 = vpop.f32.mrf.mxu0
    %v937 = vadd.f32 %v876, %v936
    %v938 = vpop.f32.mrf.mxu0
    %939 = vdwg.mxu0
    %v940 = vld [vmem:[%s7] sm:$0x1]
    %v942 = vlaneseq
    %v943 = vshrl.u32 %v942, 7
    %v944 = vsub.s32 0, %v943
    %v945 = vrot.slane %v940, %v944
    %v947 = vadd.f32 %v934, %v945
    %v948 = vadd.f32 %v937, %v945
    %v949 = vmax.f32 %v947, 0.0
    %v950 = vmax.f32 %v948, 0.0
    %v951 = vmul.f32 %v949, %v949
    %v952 = vmul.f32 %v950, %v950
    %953 = vadd.xlane.f32.xlu0 %v951
    %v954 = vpop.xlane.xlu0 %953
    %955 = vadd.xlane.f32.xlu0 %v952
    %v956 = vpop.xlane.xlu0 %955
    %v957 = vmax.f32 %v954, 1e-12
    %v958 = vmax.f32 %v956, 1e-12
    %v959 = vrsqrt.pop %v957
    %v960 = vrsqrt.pop %v958
    %v961 = vmul.f32 %v949, %v959
    %v962 = vmul.f32 %v950, %v960
    %963 = vst [vmem:[#allocation2] sm:$0xff] %v961
    %964 = vst [vmem:[#allocation2 + $0x8] sm:$0xff] %v962
    // Predicated region
    $region34: #{tpu_custom_call.1} parent=1 // pred_check
      _
    $region35: #{tpu_custom_call.1} parent=1 // pred_check_branch
      %966 = sbr.rel (0) target = $region37
    $region36: #{tpu_custom_call.1} parent=1 // pred_region
      %s968 = ssub.s32 256, 256
      %969 = vsyncadd [#allocation3], %s968
      %s970 = sshll.u32 [#allocation2], 4
      %s971 = int_to_ptr.vmem [resolvable:$true] %s970
      %976 = dma.vmem_to_hbm [thread:$0]  %s971, 256, %s8, [#allocation3], 128, 128, 8
    $region37: #{tpu_custom_call.1} parent=1 // pred_fallthru
      _
    // Predicated region
    $region38: #{tpu_custom_call.1} parent=1 // pred_check
      _
    $region39: #{tpu_custom_call.1} parent=1 // pred_check_branch
      %978 = sbr.rel (0) target = $region41
    $region40: #{tpu_custom_call.1} parent=1 // pred_region
      %979 = dma.done [#allocation3], 256
    $region41: #{tpu_custom_call.1} parent=1 // pred_fallthru
      _
    %980 = vsyncpa [#allocation3], 1

// kernel: tpu_custom_call.1
$region0: #{tpu_custom_call.1}
  #allocation0 [shape = 'u32[]', space=smem, size = 0x4, offset = 0x4, fixed_abs, tag = 'smem constant byte address 0x4 - core index']
  #allocation1 [shape = 'u32[144,128]{1,0:T(1,128)}', space=vmem, size = 0x12000, scoped, tag = 'internal scratch']
  %s0 = inlined_call_operand.vmem [shape: bf16[16,32], index: 0, kind: input, shape index: {}]
  %s1 = inlined_call_operand.vmem [shape: bf16[128,32], index: 1, kind: input, shape index: {}]
  %s2 = inlined_call_operand.vmem [shape: f32[16,8,1], index: 2, kind: input, shape index: {}]
  %s3 = inlined_call_operand.vmem [shape: bf16[32,128], index: 3, kind: input, shape index: {}]
  %s4 = inlined_call_operand.vmem [shape: f32[1,128], index: 4, kind: input, shape index: {}]
  %s5 = inlined_call_operand.vmem [shape: bf16[32,128], index: 5, kind: input, shape index: {}]
  %s6 = inlined_call_operand.vmem [shape: bf16[128,128], index: 6, kind: input, shape index: {}]
  %s7 = inlined_call_operand.vmem [shape: f32[1,128], index: 7, kind: input, shape index: {}]
  %s8 = inlined_call_operand.hbm [shape: f32[16,128], index: 8, kind: output, shape index: {}]
  %s9 = sld [smem:[#allocation0]]
  $region42: #{tpu_custom_call.1} parent=0
    _
  %s11 = ssub.s32 1, %s9
  %s12 = scalar_select 0, %s11, %s9
  $region1: #{tpu_custom_call.1} parent=0
    #allocation2 [shape = 'u8[8192]{0}', space=vmem, size = 0x2000, scoped, tag = 'output window, operand 0, single buffered']
    #allocation3 [shape = 's32[1]{0}', space=sflag, size = 0x4, scoped, tag = 'scoped memory for tpu_custom_call.1']
    %13 = vsyncpa [#allocation3], 0
    // Predicated region
    $region2: #{tpu_custom_call.1} parent=1 // pred_check
      _
    $region3: #{tpu_custom_call.1} parent=1 // pred_check_branch
      %15 = sbr.rel (0) target = $region5
    $region4: #{tpu_custom_call.1} parent=1 // pred_region
      _
    $region5: #{tpu_custom_call.1} parent=1 // pred_fallthru
      _
    // Predicated region
    $region6: #{tpu_custom_call.1} parent=1 // pred_check
      _
    $region7: #{tpu_custom_call.1} parent=1 // pred_check_branch
      %17 = sbr.rel (0) target = $region9
    $region8: #{tpu_custom_call.1} parent=1 // pred_region
      _
    $region9: #{tpu_custom_call.1} parent=1 // pred_fallthru
      _
    // Predicated region
    $region10: #{tpu_custom_call.1} parent=1 // pred_check
      _
    $region11: #{tpu_custom_call.1} parent=1 // pred_check_branch
      %19 = sbr.rel (0) target = $region13
    $region12: #{tpu_custom_call.1} parent=1 // pred_region
      _
    $region13: #{tpu_custom_call.1} parent=1 // pred_fallthru
      _
    // Predicated region
    $region14: #{tpu_custom_call.1} parent=1 // pred_check
      _
    $region15: #{tpu_custom_call.1} parent=1 // pred_check_branch
      %21 = sbr.rel (0) target = $region17
    $region16: #{tpu_custom_call.1} parent=1 // pred_region
      _
    $region17: #{tpu_custom_call.1} parent=1 // pred_fallthru
      _
    // Predicated region
    $region18: #{tpu_custom_call.1} parent=1 // pred_check
      _
    $region19: #{tpu_custom_call.1} parent=1 // pred_check_branch
      %23 = sbr.rel (0) target = $region21
    $region20: #{tpu_custom_call.1} parent=1 // pred_region
      _
    $region21: #{tpu_custom_call.1} parent=1 // pred_fallthru
      _
    // Predicated region
    $region22: #{tpu_custom_call.1} parent=1 // pred_check
      _
    $region23: #{tpu_custom_call.1} parent=1 // pred_check_branch
      %25 = sbr.rel (0) target = $region25
    $region24: #{tpu_custom_call.1} parent=1 // pred_region
      _
    $region25: #{tpu_custom_call.1} parent=1 // pred_fallthru
      _
    // Predicated region
    $region26: #{tpu_custom_call.1} parent=1 // pred_check
      _
    $region27: #{tpu_custom_call.1} parent=1 // pred_check_branch
      %27 = sbr.rel (0) target = $region29
    $region28: #{tpu_custom_call.1} parent=1 // pred_region
      _
    $region29: #{tpu_custom_call.1} parent=1 // pred_fallthru
      _
    // Predicated region
    $region30: #{tpu_custom_call.1} parent=1 // pred_check
      _
    $region31: #{tpu_custom_call.1} parent=1 // pred_check_branch
      %29 = sbr.rel (0) target = $region33
    $region32: #{tpu_custom_call.1} parent=1 // pred_region
      _
    $region33: #{tpu_custom_call.1} parent=1 // pred_fallthru
      _
    %v31 = vld [vmem:[%s1] sm:$0xf]
    %v32 = vld [vmem:[%s1 + $0x4] sm:$0xf]
    %v33 = vld [vmem:[%s1 + $0x8] sm:$0xf]
    %v34 = vld [vmem:[%s1 + $0xc] sm:$0xf]
    %v35 = vld [vmem:[%s1 + $0x10] sm:$0xf]
    %v36 = vld [vmem:[%s1 + $0x14] sm:$0xf]
    %v37 = vld [vmem:[%s1 + $0x18] sm:$0xf]
    %v38 = vld [vmem:[%s1 + $0x1c] sm:$0xf]
    %v39 = vld [vmem:[%s1 + $0x20] sm:$0xf]
    %v40 = vld [vmem:[%s1 + $0x24] sm:$0xf]
    %v41 = vld [vmem:[%s1 + $0x28] sm:$0xf]
    %v42 = vld [vmem:[%s1 + $0x2c] sm:$0xf]
    %v43 = vld [vmem:[%s1 + $0x30] sm:$0xf]
    %v44 = vld [vmem:[%s1 + $0x34] sm:$0xf]
    %v45 = vld [vmem:[%s1 + $0x38] sm:$0xf]
    %v46 = vld [vmem:[%s1 + $0x3c] sm:$0xf]
    %v47 = vld [vmem:[%s3] sm:$0xf]
    %v48 = vld [vmem:[%s3 + $0x4] sm:$0xf]
    %v49 = vld [vmem:[%s3 + $0x8] sm:$0xf]
    %v50 = vld [vmem:[%s3 + $0xc] sm:$0xf]
    %v51 = vld [vmem:[%s4] sm:$0x1]
    %v53 = vlaneseq
    %v54 = vshrl.u32 %v53, 7
    %v55 = vsub.s32 0, %v54
    %v56 = vrot.slane %v51, %v55
    %v74 = vunpack.c.l.b16 %v31
    %v75 = vunpack.c.l.b16 %v32
    %v76 = vunpack.c.l.b16 %v33
    %v77 = vunpack.c.l.b16 %v34
    %v78 = vunpack.c.l.b16 %v35
    %v79 = vunpack.c.l.b16 %v36
    %v80 = vunpack.c.l.b16 %v37
    %v81 = vunpack.c.l.b16 %v38
    %v82 = vunpack.c.l.b16 %v39
    %v83 = vunpack.c.l.b16 %v40
    %v84 = vunpack.c.l.b16 %v41
    %v85 = vunpack.c.l.b16 %v42
    %v86 = vunpack.c.l.b16 %v43
    %v87 = vunpack.c.l.b16 %v44
    %v88 = vunpack.c.l.b16 %v45
    %v89 = vunpack.c.l.b16 %v46
    %v90 = vpack.c.b16 %v75, %v74
    %v91 = vpack.c.b16 %v77, %v76
    %v92 = vpack.c.b16 %v79, %v78
    %v93 = vpack.c.b16 %v81, %v80
    %v94 = vpack.c.b16 %v83, %v82
    %v95 = vpack.c.b16 %v85, %v84
    %v96 = vpack.c.b16 %v87, %v86
    %v97 = vpack.c.b16 %v89, %v88
    %v102 = vunpack.c.l.b16 %v47
    %v103 = vunpack.c.l.b16 %v48
    %v104 = vunpack.c.l.b16 %v49
    %v105 = vunpack.c.l.b16 %v50
    %v106 = vpack.c.b16 %v103, %v102
    %v107 = vpack.c.b16 %v105, %v104
    %vm110 = vcmask 261120
    %v112 = vsel %vm110, %v90, 0
    %v115 = vsel %vm110, %v91, 0
    %v118 = vsel %vm110, %v92, 0
    %v121 = vsel %vm110, %v93, 0
    %v124 = vsel %vm110, %v94, 0
    %v127 = vsel %vm110, %v95, 0
    %v130 = vsel %vm110, %v96, 0
    %v133 = vsel %vm110, %v97, 0
    %135 = vmatprep.subr.bf16.mxu0 0
    %136 = vmatpush1.bf16.msra.mxu0 0
    %137 = vmatprep.subr.bf16.mxu0 0
    %138 = vmatpush1.bf16.msra.mxu0 0
    %139 = vmatprep.subr.bf16.mxu0 0
    %140 = vmatpush1.bf16.msra.mxu0 0
    %141 = vmatprep.subr.bf16.mxu0 0
    %142 = vmatpush1.bf16.msra.mxu0 0
    %143 = vmatprep.subr.bf16.mxu0 0
    %144 = vmatpush1.bf16.msra.mxu0 0
    %145 = vmatprep.subr.bf16.mxu0 0
    %146 = vmatpush1.bf16.msra.mxu0 0
    %147 = vmatprep.subr.bf16.mxu0 0
    %148 = vmatpush1.bf16.msra.mxu0 %v107
    %149 = vmatprep.subr.bf16.mxu0 0
    %150 = vmatpush1.bf16.msra.mxu0 %v106
    %151 = vmatprep.subr.bf16.mxu0 0
    %152 = vmatpush2.bf16.msra.mxu0 0
    %153 = vmatprep.subr.bf16.mxu0 0
    %154 = vmatpush2.bf16.msra.mxu0 0
    %155 = vmatprep.subr.bf16.mxu0 0
    %156 = vmatpush2.bf16.msra.mxu0 0
    %157 = vmatprep.subr.bf16.mxu0 0
    %158 = vmatpush2.bf16.msra.mxu0 0
    %159 = vmatprep.subr.bf16.mxu0 0
    %160 = vmatpush2.bf16.msra.mxu0 0
    %161 = vmatprep.subr.bf16.mxu0 0
    %162 = vmatpush2.bf16.msra.mxu0 0
    %163 = vmatprep.subr.bf16.mxu0 0
    %164 = vmatpush2.bf16.msra.mxu0 0
    %165 = vmatprep.subr.bf16.mxu0 0
    %166 = vmatpush2.bf16.msra.mxu0 0
    %167 = vmatprep.mubr.bf16.mxu0 0
    %168 = vmatmul.mubr.bf16.gmra.mxu0 %v112
    %v169 = vpop.f32.mrf.mxu0
    %v170 = vadd.f32 %v56, %v169
    %v171 = vpop.f32.mrf.mxu0
    %v172 = vpop.f32.mrf.mxu0
    %v173 = vadd.f32 %v56, %v172
    %v174 = vpop.f32.mrf.mxu0
    %175 = vmatprep.mubr.bf16.mxu0 0
    %176 = vmatmul.mubr.bf16.gmra.mxu0 %v115
    %v177 = vpop.f32.mrf.mxu0
    %v178 = vadd.f32 %v56, %v177
    %v179 = vpop.f32.mrf.mxu0
    %v180 = vpop.f32.mrf.mxu0
    %v181 = vadd.f32 %v56, %v180
    %v182 = vpop.f32.mrf.mxu0
    %183 = vmatprep.mubr.bf16.mxu0 0
    %184 = vmatmul.mubr.bf16.gmra.mxu0 %v118
    %v185 = vpop.f32.mrf.mxu0
    %v186 = vadd.f32 %v56, %v185
    %v187 = vpop.f32.mrf.mxu0
    %v188 = vpop.f32.mrf.mxu0
    %v189 = vadd.f32 %v56, %v188
    %v190 = vpop.f32.mrf.mxu0
    %191 = vmatprep.mubr.bf16.mxu0 0
    %192 = vmatmul.mubr.bf16.gmra.mxu0 %v121
    %v193 = vpop.f32.mrf.mxu0
    %v194 = vadd.f32 %v56, %v193
    %v195 = vpop.f32.mrf.mxu0
    %v196 = vpop.f32.mrf.mxu0
    %v197 = vadd.f32 %v56, %v196
    %v198 = vpop.f32.mrf.mxu0
    %199 = vmatprep.mubr.bf16.mxu0 0
    %200 = vmatmul.mubr.bf16.gmra.mxu0 %v124
    %v201 = vpop.f32.mrf.mxu0
    %v202 = vadd.f32 %v56, %v201
    %v203 = vpop.f32.mrf.mxu0
    %v204 = vpop.f32.mrf.mxu0
    %v205 = vadd.f32 %v56, %v204
    %v206 = vpop.f32.mrf.mxu0
    %207 = vmatprep.mubr.bf16.mxu0 0
    %208 = vmatmul.mubr.bf16.gmra.mxu0 %v127
    %v209 = vpop.f32.mrf.mxu0
    %v210 = vadd.f32 %v56, %v209
    %v211 = vpop.f32.mrf.mxu0
    %v212 = vpop.f32.mrf.mxu0
    %v213 = vadd.f32 %v56, %v212
    %v214 = vpop.f32.mrf.mxu0
    %215 = vmatprep.mubr.bf16.mxu0 0
    %216 = vmatmul.mubr.bf16.gmra.mxu0 %v130
    %v217 = vpop.f32.mrf.mxu0
    %v218 = vadd.f32 %v56, %v217
    %v219 = vpop.f32.mrf.mxu0
    %v220 = vpop.f32.mrf.mxu0
    %v221 = vadd.f32 %v56, %v220
    %v222 = vpop.f32.mrf.mxu0
    %223 = vmatprep.mubr.bf16.mxu0 0
    %224 = vmatmul.mubr.bf16.gmra.mxu0 %v133
    %v225 = vpop.f32.mrf.mxu0
    %v226 = vadd.f32 %v56, %v225
    %v227 = vpop.f32.mrf.mxu0
    %v228 = vpop.f32.mrf.mxu0
    %v229 = vadd.f32 %v56, %v228
    %v230 = vpop.f32.mrf.mxu0
    %231 = vdwg.mxu0
    %v232 = vmax.f32 %v170, 0.0
    %v233 = vmax.f32 %v173, 0.0
    %v234 = vmax.f32 %v178, 0.0
    %v235 = vmax.f32 %v181, 0.0
    %v236 = vmax.f32 %v186, 0.0
    %v237 = vmax.f32 %v189, 0.0
    %v238 = vmax.f32 %v194, 0.0
    %v239 = vmax.f32 %v197, 0.0
    %v240 = vmax.f32 %v202, 0.0
    %v241 = vmax.f32 %v205, 0.0
    %v242 = vmax.f32 %v210, 0.0
    %v243 = vmax.f32 %v213, 0.0
    %v244 = vmax.f32 %v218, 0.0
    %v245 = vmax.f32 %v221, 0.0
    %v246 = vmax.f32 %v226, 0.0
    %v247 = vmax.f32 %v229, 0.0
    %v248 = vld [vmem:[%s2] sm:$0xff]
    %v249 = vld [vmem:[%s2 + $0x8] sm:$0xff]
    %v250 = vld [vmem:[%s2 + $0x10] sm:$0xff]
    %v251 = vld [vmem:[%s2 + $0x18] sm:$0xff]
    %v252 = vld [vmem:[%s2 + $0x20] sm:$0xff]
    %v253 = vld [vmem:[%s2 + $0x28] sm:$0xff]
    %v254 = vld [vmem:[%s2 + $0x30] sm:$0xff]
    %v255 = vld [vmem:[%s2 + $0x38] sm:$0xff]
    %v256 = vld [vmem:[%s2 + $0x40] sm:$0xff]
    %v257 = vld [vmem:[%s2 + $0x48] sm:$0xff]
    %v258 = vld [vmem:[%s2 + $0x50] sm:$0xff]
    %v259 = vld [vmem:[%s2 + $0x58] sm:$0xff]
    %v260 = vld [vmem:[%s2 + $0x60] sm:$0xff]
    %v261 = vld [vmem:[%s2 + $0x68] sm:$0xff]
    %v262 = vld [vmem:[%s2 + $0x70] sm:$0xff]
    %v263 = vld [vmem:[%s2 + $0x78] sm:$0xff]
    %265 = vset.pattern.permute.xlu0 0
    %266 = vperm.xlu0 %265, %v248
    %v267 = vpop.permute.xlu0 %266
    %270 = vset.pattern.permute.xlu0 0
    %271 = vperm.xlu0 %270, %v249
    %v272 = vpop.permute.xlu0 %271
    %275 = vset.pattern.permute.xlu0 0
    %276 = vperm.xlu0 %275, %v250
    %v277 = vpop.permute.xlu0 %276
    %280 = vset.pattern.permute.xlu0 0
    %281 = vperm.xlu0 %280, %v251
    %v282 = vpop.permute.xlu0 %281
    %285 = vset.pattern.permute.xlu0 0
    %286 = vperm.xlu0 %285, %v252
    %v287 = vpop.permute.xlu0 %286
    %290 = vset.pattern.permute.xlu0 0
    %291 = vperm.xlu0 %290, %v253
    %v292 = vpop.permute.xlu0 %291
    %295 = vset.pattern.permute.xlu0 0
    %296 = vperm.xlu0 %295, %v254
    %v297 = vpop.permute.xlu0 %296
    %300 = vset.pattern.permute.xlu0 0
    %301 = vperm.xlu0 %300, %v255
    %v302 = vpop.permute.xlu0 %301
    %305 = vset.pattern.permute.xlu0 0
    %306 = vperm.xlu0 %305, %v256
    %v307 = vpop.permute.xlu0 %306
    %310 = vset.pattern.permute.xlu0 0
    %311 = vperm.xlu0 %310, %v257
    %v312 = vpop.permute.xlu0 %311
    %315 = vset.pattern.permute.xlu0 0
    %316 = vperm.xlu0 %315, %v258
    %v317 = vpop.permute.xlu0 %316
    %320 = vset.pattern.permute.xlu0 0
    %321 = vperm.xlu0 %320, %v259
    %v322 = vpop.permute.xlu0 %321
    %325 = vset.pattern.permute.xlu0 0
    %326 = vperm.xlu0 %325, %v260
    %v327 = vpop.permute.xlu0 %326
    %330 = vset.pattern.permute.xlu0 0
    %331 = vperm.xlu0 %330, %v261
    %v332 = vpop.permute.xlu0 %331
    %335 = vset.pattern.permute.xlu0 0
    %336 = vperm.xlu0 %335, %v262
    %v337 = vpop.permute.xlu0 %336
    %340 = vset.pattern.permute.xlu0 0
    %341 = vperm.xlu0 %340, %v263
    %v342 = vpop.permute.xlu0 %341
    %v344 = vmul.f32 %v267, %v232
    %v345 = vmul.f32 %v272, %v233
    %v346 = vmul.f32 %v277, %v234
    %v347 = vmul.f32 %v282, %v235
    %v348 = vmul.f32 %v287, %v236
    %v349 = vmul.f32 %v292, %v237
    %v350 = vmul.f32 %v297, %v238
    %v351 = vmul.f32 %v302, %v239
    %v352 = vmul.f32 %v307, %v240
    %v353 = vmul.f32 %v312, %v241
    %v354 = vmul.f32 %v317, %v242
    %v355 = vmul.f32 %v322, %v243
    %v356 = vmul.f32 %v327, %v244
    %v357 = vmul.f32 %v332, %v245
    %v358 = vmul.f32 %v337, %v246
    %v359 = vmul.f32 %v342, %v247
    %v360 = vrot.slane %v344, 4
    %v361 = vadd.f32 %v344, %v360
    %v362 = vrot.slane %v361, 2
    %v363 = vadd.f32 %v361, %v362
    %v364 = vrot.slane %v363, 1
    %v365 = vadd.f32 %v363, %v364
    %v366 = vrot.slane %v345, 4
    %v367 = vadd.f32 %v345, %v366
    %v368 = vrot.slane %v367, 2
    %v369 = vadd.f32 %v367, %v368
    %v370 = vrot.slane %v369, 1
    %v371 = vadd.f32 %v369, %v370
    %v372 = vrot.slane %v346, 4
    %v373 = vadd.f32 %v346, %v372
    %v374 = vrot.slane %v373, 2
    %v375 = vadd.f32 %v373, %v374
    %v376 = vrot.slane %v375, 1
    %v377 = vadd.f32 %v375, %v376
    %v378 = vrot.slane %v347, 4
    %v379 = vadd.f32 %v347, %v378
    %v380 = vrot.slane %v379, 2
    %v381 = vadd.f32 %v379, %v380
    %v382 = vrot.slane %v381, 1
    %v383 = vadd.f32 %v381, %v382
    %v384 = vrot.slane %v348, 4
    %v385 = vadd.f32 %v348, %v384
    %v386 = vrot.slane %v385, 2
    %v387 = vadd.f32 %v385, %v386
    %v388 = vrot.slane %v387, 1
    %v389 = vadd.f32 %v387, %v388
    %v390 = vrot.slane %v349, 4
    %v391 = vadd.f32 %v349, %v390
    %v392 = vrot.slane %v391, 2
    %v393 = vadd.f32 %v391, %v392
    %v394 = vrot.slane %v393, 1
    %v395 = vadd.f32 %v393, %v394
    %v396 = vrot.slane %v350, 4
    %v397 = vadd.f32 %v350, %v396
    %v398 = vrot.slane %v397, 2
    %v399 = vadd.f32 %v397, %v398
    %v400 = vrot.slane %v399, 1
    %v401 = vadd.f32 %v399, %v400
    %v402 = vrot.slane %v351, 4
    %v403 = vadd.f32 %v351, %v402
    %v404 = vrot.slane %v403, 2
    %v405 = vadd.f32 %v403, %v404
    %v406 = vrot.slane %v405, 1
    %v407 = vadd.f32 %v405, %v406
    %v408 = vrot.slane %v352, 4
    %v409 = vadd.f32 %v352, %v408
    %v410 = vrot.slane %v409, 2
    %v411 = vadd.f32 %v409, %v410
    %v412 = vrot.slane %v411, 1
    %v413 = vadd.f32 %v411, %v412
    %v414 = vrot.slane %v353, 4
    %v415 = vadd.f32 %v353, %v414
    %v416 = vrot.slane %v415, 2
    %v417 = vadd.f32 %v415, %v416
    %v418 = vrot.slane %v417, 1
    %v419 = vadd.f32 %v417, %v418
    %v420 = vrot.slane %v354, 4
    %v421 = vadd.f32 %v354, %v420
    %v422 = vrot.slane %v421, 2
    %v423 = vadd.f32 %v421, %v422
    %v424 = vrot.slane %v423, 1
    %v425 = vadd.f32 %v423, %v424
    %v426 = vrot.slane %v355, 4
    %v427 = vadd.f32 %v355, %v426
    %v428 = vrot.slane %v427, 2
    %v429 = vadd.f32 %v427, %v428
    %v430 = vrot.slane %v429, 1
    %v431 = vadd.f32 %v429, %v430
    %v432 = vrot.slane %v356, 4
    %v433 = vadd.f32 %v356, %v432
    %v434 = vrot.slane %v433, 2
    %v435 = vadd.f32 %v433, %v434
    %v436 = vrot.slane %v435, 1
    %v437 = vadd.f32 %v435, %v436
    %v438 = vrot.slane %v357, 4
    %v439 = vadd.f32 %v357, %v438
    %v440 = vrot.slane %v439, 2
    %v441 = vadd.f32 %v439, %v440
    %v442 = vrot.slane %v441, 1
    %v443 = vadd.f32 %v441, %v442
    %v444 = vrot.slane %v358, 4
    %v445 = vadd.f32 %v358, %v444
    %v446 = vrot.slane %v445, 2
    %v447 = vadd.f32 %v445, %v446
    %v448 = vrot.slane %v447, 1
    %v449 = vadd.f32 %v447, %v448
    %v450 = vrot.slane %v359, 4
    %v451 = vadd.f32 %v359, %v450
    %v452 = vrot.slane %v451, 2
    %v453 = vadd.f32 %v451, %v452
    %v454 = vrot.slane %v453, 1
    %v455 = vadd.f32 %v453, %v454
    %vm456 = vcmask 7168
    %v457 = vsel %vm456, %v248, 0.0
    %v458 = vrot.slane %v457, 4
    %v459 = vadd.f32 %v457, %v458
    %v460 = vrot.slane %v459, 2
    %v461 = vadd.f32 %v459, %v460
    %v462 = vrot.slane %v461, 1
    %v463 = vadd.f32 %v461, %v462
    %v464 = vsel %vm456, %v249, 0.0
    %v465 = vrot.slane %v464, 4
    %v466 = vadd.f32 %v464, %v465
    %v467 = vrot.slane %v466, 2
    %v468 = vadd.f32 %v466, %v467
    %v469 = vrot.slane %v468, 1
    %v470 = vadd.f32 %v468, %v469
    %v471 = vsel %vm456, %v250, 0.0
    %v472 = vrot.slane %v471, 4
    %v473 = vadd.f32 %v471, %v472
    %v474 = vrot.slane %v473, 2
    %v475 = vadd.f32 %v473, %v474
    %v476 = vrot.slane %v475, 1
    %v477 = vadd.f32 %v475, %v476
    %v478 = vsel %vm456, %v251, 0.0
    %v479 = vrot.slane %v478, 4
    %v480 = vadd.f32 %v478, %v479
    %v481 = vrot.slane %v480, 2
    %v482 = vadd.f32 %v480, %v481
    %v483 = vrot.slane %v482, 1
    %v484 = vadd.f32 %v482, %v483
    %v485 = vsel %vm456, %v252, 0.0
    %v486 = vrot.slane %v485, 4
    %v487 = vadd.f32 %v485, %v486
    %v488 = vrot.slane %v487, 2
    %v489 = vadd.f32 %v487, %v488
    %v490 = vrot.slane %v489, 1
    %v491 = vadd.f32 %v489, %v490
    %v492 = vsel %vm456, %v253, 0.0
    %v493 = vrot.slane %v492, 4
    %v494 = vadd.f32 %v492, %v493
    %v495 = vrot.slane %v494, 2
    %v496 = vadd.f32 %v494, %v495
    %v497 = vrot.slane %v496, 1
    %v498 = vadd.f32 %v496, %v497
    %v499 = vsel %vm456, %v254, 0.0
    %v500 = vrot.slane %v499, 4
    %v501 = vadd.f32 %v499, %v500
    %v502 = vrot.slane %v501, 2
    %v503 = vadd.f32 %v501, %v502
    %v504 = vrot.slane %v503, 1
    %v505 = vadd.f32 %v503, %v504
    %v506 = vsel %vm456, %v255, 0.0
    %v507 = vrot.slane %v506, 4
    %v508 = vadd.f32 %v506, %v507
    %v509 = vrot.slane %v508, 2
    %v510 = vadd.f32 %v508, %v509
    %v511 = vrot.slane %v510, 1
    %v512 = vadd.f32 %v510, %v511
    %v513 = vsel %vm456, %v256, 0.0
    %v514 = vrot.slane %v513, 4
    %v515 = vadd.f32 %v513, %v514
    %v516 = vrot.slane %v515, 2
    %v517 = vadd.f32 %v515, %v516
    %v518 = vrot.slane %v517, 1
    %v519 = vadd.f32 %v517, %v518
    %v520 = vsel %vm456, %v257, 0.0
    %v521 = vrot.slane %v520, 4
    %v522 = vadd.f32 %v520, %v521
    %v523 = vrot.slane %v522, 2
    %v524 = vadd.f32 %v522, %v523
    %v525 = vrot.slane %v524, 1
    %v526 = vadd.f32 %v524, %v525
    %v527 = vsel %vm456, %v258, 0.0
    %v528 = vrot.slane %v527, 4
    %v529 = vadd.f32 %v527, %v528
    %v530 = vrot.slane %v529, 2
    %v531 = vadd.f32 %v529, %v530
    %v532 = vrot.slane %v531, 1
    %v533 = vadd.f32 %v531, %v532
    %v534 = vsel %vm456, %v259, 0.0
    %v535 = vrot.slane %v534, 4
    %v536 = vadd.f32 %v534, %v535
    %v537 = vrot.slane %v536, 2
    %v538 = vadd.f32 %v536, %v537
    %v539 = vrot.slane %v538, 1
    %v540 = vadd.f32 %v538, %v539
    %v541 = vsel %vm456, %v260, 0.0
    %v542 = vrot.slane %v541, 4
    %v543 = vadd.f32 %v541, %v542
    %v544 = vrot.slane %v543, 2
    %v545 = vadd.f32 %v543, %v544
    %v546 = vrot.slane %v545, 1
    %v547 = vadd.f32 %v545, %v546
    %v548 = vsel %vm456, %v261, 0.0
    %v549 = vrot.slane %v548, 4
    %v550 = vadd.f32 %v548, %v549
    %v551 = vrot.slane %v550, 2
    %v552 = vadd.f32 %v550, %v551
    %v553 = vrot.slane %v552, 1
    %v554 = vadd.f32 %v552, %v553
    %v555 = vsel %vm456, %v262, 0.0
    %v556 = vrot.slane %v555, 4
    %v557 = vadd.f32 %v555, %v556
    %v558 = vrot.slane %v557, 2
    %v559 = vadd.f32 %v557, %v558
    %v560 = vrot.slane %v559, 1
    %v561 = vadd.f32 %v559, %v560
    %v562 = vsel %vm456, %v263, 0.0
    %v563 = vrot.slane %v562, 4
    %v564 = vadd.f32 %v562, %v563
    %v565 = vrot.slane %v564, 2
    %v566 = vadd.f32 %v564, %v565
    %v567 = vrot.slane %v566, 1
    %v568 = vadd.f32 %v566, %v567
    %v569 = vmax.f32 %v463, 1e-12
    %v570 = vmax.f32 %v470, 1e-12
    %v571 = vmax.f32 %v477, 1e-12
    %v572 = vmax.f32 %v484, 1e-12
    %v573 = vmax.f32 %v491, 1e-12
    %v574 = vmax.f32 %v498, 1e-12
    %v575 = vmax.f32 %v505, 1e-12
    %v576 = vmax.f32 %v512, 1e-12
    %v577 = vmax.f32 %v519, 1e-12
    %v578 = vmax.f32 %v526, 1e-12
    %v579 = vmax.f32 %v533, 1e-12
    %v580 = vmax.f32 %v540, 1e-12
    %v581 = vmax.f32 %v547, 1e-12
    %v582 = vmax.f32 %v554, 1e-12
    %v583 = vmax.f32 %v561, 1e-12
    %v584 = vmax.f32 %v568, 1e-12
    %v585 = vrcp.pop %v569
    %v586 = vrcp.pop %v570
    %v587 = vrcp.pop %v571
    %v588 = vrcp.pop %v572
    %v589 = vrcp.pop %v573
    %v590 = vrcp.pop %v574
    %v591 = vrcp.pop %v575
    %v592 = vrcp.pop %v576
    %v593 = vrcp.pop %v577
    %v594 = vrcp.pop %v578
    %v595 = vrcp.pop %v579
    %v596 = vrcp.pop %v580
    %v597 = vrcp.pop %v581
    %v598 = vrcp.pop %v582
    %v599 = vrcp.pop %v583
    %v600 = vrcp.pop %v584
    %602 = vset.pattern.permute.xlu0 0
    %603 = vperm.xlu0 %602, %v585
    %v604 = vpop.permute.xlu0 %603
    %607 = vset.pattern.permute.xlu0 0
    %608 = vperm.xlu0 %607, %v586
    %v609 = vpop.permute.xlu0 %608
    %612 = vset.pattern.permute.xlu0 0
    %613 = vperm.xlu0 %612, %v587
    %v614 = vpop.permute.xlu0 %613
    %617 = vset.pattern.permute.xlu0 0
    %618 = vperm.xlu0 %617, %v588
    %v619 = vpop.permute.xlu0 %618
    %622 = vset.pattern.permute.xlu0 0
    %623 = vperm.xlu0 %622, %v589
    %v624 = vpop.permute.xlu0 %623
    %627 = vset.pattern.permute.xlu0 0
    %628 = vperm.xlu0 %627, %v590
    %v629 = vpop.permute.xlu0 %628
    %632 = vset.pattern.permute.xlu0 0
    %633 = vperm.xlu0 %632, %v591
    %v634 = vpop.permute.xlu0 %633
    %637 = vset.pattern.permute.xlu0 0
    %638 = vperm.xlu0 %637, %v592
    %v639 = vpop.permute.xlu0 %638
    %642 = vset.pattern.permute.xlu0 0
    %643 = vperm.xlu0 %642, %v593
    %v644 = vpop.permute.xlu0 %643
    %647 = vset.pattern.permute.xlu0 0
    %648 = vperm.xlu0 %647, %v594
    %v649 = vpop.permute.xlu0 %648
    %652 = vset.pattern.permute.xlu0 0
    %653 = vperm.xlu0 %652, %v595
    %v654 = vpop.permute.xlu0 %653
    %657 = vset.pattern.permute.xlu0 0
    %658 = vperm.xlu0 %657, %v596
    %v659 = vpop.permute.xlu0 %658
    %662 = vset.pattern.permute.xlu0 0
    %663 = vperm.xlu0 %662, %v597
    %v664 = vpop.permute.xlu0 %663
    %667 = vset.pattern.permute.xlu0 0
    %668 = vperm.xlu0 %667, %v598
    %v669 = vpop.permute.xlu0 %668
    %672 = vset.pattern.permute.xlu0 0
    %673 = vperm.xlu0 %672, %v599
    %v674 = vpop.permute.xlu0 %673
    %677 = vset.pattern.permute.xlu0 0
    %678 = vperm.xlu0 %677, %v600
    %v679 = vpop.permute.xlu0 %678
    %v681 = vmul.f32 %v365, %v604
    %v682 = vmul.f32 %v371, %v609
    %v683 = vmul.f32 %v377, %v614
    %v684 = vmul.f32 %v383, %v619
    %v685 = vmul.f32 %v389, %v624
    %v686 = vmul.f32 %v395, %v629
    %v687 = vmul.f32 %v401, %v634
    %v688 = vmul.f32 %v407, %v639
    %v689 = vmul.f32 %v413, %v644
    %v690 = vmul.f32 %v419, %v649
    %v691 = vmul.f32 %v425, %v654
    %v692 = vmul.f32 %v431, %v659
    %v693 = vmul.f32 %v437, %v664
    %v694 = vmul.f32 %v443, %v669
    %v695 = vmul.f32 %v449, %v674
    %v696 = vmul.f32 %v455, %v679
    %v697 = vld [vmem:[%s0] sm:$0xf]
    %v698 = vld [vmem:[%s0 + $0x4] sm:$0xf]
    %v699 = vld [vmem:[%s5] sm:$0xf]
    %v700 = vld [vmem:[%s5 + $0x4] sm:$0xf]
    %v701 = vld [vmem:[%s5 + $0x8] sm:$0xf]
    %v702 = vld [vmem:[%s5 + $0xc] sm:$0xf]
    %v703 = vpack.c.bf16 %v681, %v681
    %v704 = vpack.c.bf16 %v682, %v682
    %v705 = vpack.c.bf16 %v683, %v683
    %v706 = vpack.c.bf16 %v684, %v684
    %v707 = vpack.c.bf16 %v685, %v685
    %v708 = vpack.c.bf16 %v686, %v686
    %v709 = vpack.c.bf16 %v687, %v687
    %v710 = vpack.c.bf16 %v688, %v688
    %v711 = vpack.c.bf16 %v689, %v689
    %v712 = vpack.c.bf16 %v690, %v690
    %v713 = vpack.c.bf16 %v691, %v691
    %v714 = vpack.c.bf16 %v692, %v692
    %v715 = vpack.c.bf16 %v693, %v693
    %v716 = vpack.c.bf16 %v694, %v694
    %v717 = vpack.c.bf16 %v695, %v695
    %v718 = vpack.c.bf16 %v696, %v696
    %v719 = vld [vmem:[%s6] sm:$0xf]
    %v720 = vld [vmem:[%s6 + $0x4] sm:$0xf]
    %v721 = vld [vmem:[%s6 + $0x8] sm:$0xf]
    %v722 = vld [vmem:[%s6 + $0xc] sm:$0xf]
    %v723 = vld [vmem:[%s6 + $0x10] sm:$0xf]
    %v724 = vld [vmem:[%s6 + $0x14] sm:$0xf]
    %v725 = vld [vmem:[%s6 + $0x18] sm:$0xf]
    %v726 = vld [vmem:[%s6 + $0x1c] sm:$0xf]
    %v727 = vld [vmem:[%s6 + $0x20] sm:$0xf]
    %v728 = vld [vmem:[%s6 + $0x24] sm:$0xf]
    %v729 = vld [vmem:[%s6 + $0x28] sm:$0xf]
    %v730 = vld [vmem:[%s6 + $0x2c] sm:$0xf]
    %v731 = vld [vmem:[%s6 + $0x30] sm:$0xf]
    %v732 = vld [vmem:[%s6 + $0x34] sm:$0xf]
    %v733 = vld [vmem:[%s6 + $0x38] sm:$0xf]
    %v734 = vld [vmem:[%s6 + $0x3c] sm:$0xf]
    %v751 = vunpack.c.l.b16 %v703
    %v752 = vunpack.c.l.b16 %v704
    %v753 = vunpack.c.l.b16 %v705
    %v754 = vunpack.c.l.b16 %v706
    %v755 = vunpack.c.l.b16 %v707
    %v756 = vunpack.c.l.b16 %v708
    %v757 = vunpack.c.l.b16 %v709
    %v758 = vunpack.c.l.b16 %v710
    %v759 = vunpack.c.l.b16 %v711
    %v760 = vunpack.c.l.b16 %v712
    %v761 = vunpack.c.l.b16 %v713
    %v762 = vunpack.c.l.b16 %v714
    %v763 = vunpack.c.l.b16 %v715
    %v764 = vunpack.c.l.b16 %v716
    %v765 = vunpack.c.l.b16 %v717
    %v766 = vunpack.c.l.b16 %v718
    %vm767 = vcmask 1041409
    %v768 = vsel %vm767, %v752, %v751
    %vm769 = vcmask 1042434
    %v770 = vsel %vm769, %v753, %v768
    %vm771 = vcmask 1043459
    %v772 = vsel %vm771, %v754, %v770
    %vm773 = vcmask 1044484
    %v774 = vsel %vm773, %v755, %v772
    %vm775 = vcmask 1045509
    %v776 = vsel %vm775, %v756, %v774
    %vm777 = vcmask 1046534
    %v778 = vsel %vm777, %v757, %v776
    %vm779 = vcmask 1047559
    %v780 = vsel %vm779, %v758, %v778
    %v781 = vsel %vm767, %v760, %v759
    %v782 = vsel %vm769, %v761, %v781
    %v783 = vsel %vm771, %v762, %v782
    %v784 = vsel %vm773, %v763, %v783
    %v785 = vsel %vm775, %v764, %v784
    %v786 = vsel %vm777, %v765, %v785
    %v787 = vsel %vm779, %v766, %v786
    %v788 = vpack.c.b16 %v787, %v780
    %v806 = vunpack.c.l.b16 %v719
    %v807 = vunpack.c.l.b16 %v720
    %v808 = vunpack.c.l.b16 %v721
    %v809 = vunpack.c.l.b16 %v722
    %v810 = vunpack.c.l.b16 %v723
    %v811 = vunpack.c.l.b16 %v724
    %v812 = vunpack.c.l.b16 %v725
    %v813 = vunpack.c.l.b16 %v726
    %v814 = vunpack.c.l.b16 %v727
    %v815 = vunpack.c.l.b16 %v728
    %v816 = vunpack.c.l.b16 %v729
    %v817 = vunpack.c.l.b16 %v730
    %v818 = vunpack.c.l.b16 %v731
    %v819 = vunpack.c.l.b16 %v732
    %v820 = vunpack.c.l.b16 %v733
    %v821 = vunpack.c.l.b16 %v734
    %v822 = vpack.c.b16 %v807, %v806
    %v823 = vpack.c.b16 %v809, %v808
    %v824 = vpack.c.b16 %v811, %v810
    %v825 = vpack.c.b16 %v813, %v812
    %v826 = vpack.c.b16 %v815, %v814
    %v827 = vpack.c.b16 %v817, %v816
    %v828 = vpack.c.b16 %v819, %v818
    %v829 = vpack.c.b16 %v821, %v820
    %838 = vmatprep.subr.bf16.mxu0 0
    %839 = vmatpush1.bf16.msra.mxu0 %v829
    %840 = vmatprep.subr.bf16.mxu0 0
    %841 = vmatpush1.bf16.msra.mxu0 %v828
    %842 = vmatprep.subr.bf16.mxu0 0
    %843 = vmatpush1.bf16.msra.mxu0 %v827
    %844 = vmatprep.subr.bf16.mxu0 0
    %845 = vmatpush1.bf16.msra.mxu0 %v826
    %846 = vmatprep.subr.bf16.mxu0 0
    %847 = vmatpush1.bf16.msra.mxu0 %v825
    %848 = vmatprep.subr.bf16.mxu0 0
    %849 = vmatpush1.bf16.msra.mxu0 %v824
    %850 = vmatprep.subr.bf16.mxu0 0
    %851 = vmatpush1.bf16.msra.mxu0 %v823
    %852 = vmatprep.subr.bf16.mxu0 0
    %853 = vmatpush1.bf16.msra.mxu0 %v822
    %854 = vmatprep.subr.bf16.mxu0 0
    %855 = vmatpush2.bf16.msra.mxu0 0
    %856 = vmatprep.subr.bf16.mxu0 0
    %857 = vmatpush2.bf16.msra.mxu0 0
    %858 = vmatprep.subr.bf16.mxu0 0
    %859 = vmatpush2.bf16.msra.mxu0 0
    %860 = vmatprep.subr.bf16.mxu0 0
    %861 = vmatpush2.bf16.msra.mxu0 0
    %862 = vmatprep.subr.bf16.mxu0 0
    %863 = vmatpush2.bf16.msra.mxu0 0
    %864 = vmatprep.subr.bf16.mxu0 0
    %865 = vmatpush2.bf16.msra.mxu0 0
    %866 = vmatprep.subr.bf16.mxu0 0
    %867 = vmatpush2.bf16.msra.mxu0 0
    %868 = vmatprep.subr.bf16.mxu0 0
    %869 = vmatpush2.bf16.msra.mxu0 0
    %870 = vmatprep.mubr.bf16.mxu0 0
    %871 = vmatmul.mubr.bf16.gmra.mxu0 %v788
    %v872 = vpop.f32.mrf.mxu0
    %v873 = vadd.f32 0.0, %v872
    %v874 = vpop.f32.mrf.mxu0
    %v875 = vpop.f32.mrf.mxu0
    %v876 = vadd.f32 0.0, %v875
    %v877 = vpop.f32.mrf.mxu0
    %878 = vdwg.mxu0
    %v881 = vunpack.c.l.b16 %v697
    %v882 = vunpack.c.l.b16 %v698
    %v883 = vpack.c.b16 %v882, %v881
    %v888 = vunpack.c.l.b16 %v699
    %v889 = vunpack.c.l.b16 %v700
    %v890 = vunpack.c.l.b16 %v701
    %v891 = vunpack.c.l.b16 %v702
    %v892 = vpack.c.b16 %v889, %v888
    %v893 = vpack.c.b16 %v891, %v890
    %v897 = vsel %vm110, %v883, 0
    %899 = vmatprep.subr.bf16.mxu0 0
    %900 = vmatpush1.bf16.msra.mxu0 0
    %901 = vmatprep.subr.bf16.mxu0 0
    %902 = vmatpush1.bf16.msra.mxu0 0
    %903 = vmatprep.subr.bf16.mxu0 0
    %904 = vmatpush1.bf16.msra.mxu0 0
    %905 = vmatprep.subr.bf16.mxu0 0
    %906 = vmatpush1.bf16.msra.mxu0 0
    %907 = vmatprep.subr.bf16.mxu0 0
    %908 = vmatpush1.bf16.msra.mxu0 0
    %909 = vmatprep.subr.bf16.mxu0 0
    %910 = vmatpush1.bf16.msra.mxu0 0
    %911 = vmatprep.subr.bf16.mxu0 0
    %912 = vmatpush1.bf16.msra.mxu0 %v893
    %913 = vmatprep.subr.bf16.mxu0 0
    %914 = vmatpush1.bf16.msra.mxu0 %v892
    %915 = vmatprep.subr.bf16.mxu0 0
    %916 = vmatpush2.bf16.msra.mxu0 0
    %917 = vmatprep.subr.bf16.mxu0 0
    %918 = vmatpush2.bf16.msra.mxu0 0
    %919 = vmatprep.subr.bf16.mxu0 0
    %920 = vmatpush2.bf16.msra.mxu0 0
    %921 = vmatprep.subr.bf16.mxu0 0
    %922 = vmatpush2.bf16.msra.mxu0 0
    %923 = vmatprep.subr.bf16.mxu0 0
    %924 = vmatpush2.bf16.msra.mxu0 0
    %925 = vmatprep.subr.bf16.mxu0 0
    %926 = vmatpush2.bf16.msra.mxu0 0
    %927 = vmatprep.subr.bf16.mxu0 0
    %928 = vmatpush2.bf16.msra.mxu0 0
    %929 = vmatprep.subr.bf16.mxu0 0
    %930 = vmatpush2.bf16.msra.mxu0 0
    %931 = vmatprep.mubr.bf16.mxu0 0
    %932 = vmatmul.mubr.bf16.gmra.mxu0 %v897
    %v933 = vpop.f32.mrf.mxu0
    %v934 = vadd.f32 %v873, %v933
    %v935 = vpop.f32.mrf.mxu0
    %v936 = vpop.f32.mrf.mxu0
    %v937 = vadd.f32 %v876, %v936
    %v938 = vpop.f32.mrf.mxu0
    %939 = vdwg.mxu0
    %v940 = vld [vmem:[%s7] sm:$0x1]
    %v942 = vlaneseq
    %v943 = vshrl.u32 %v942, 7
    %v944 = vsub.s32 0, %v943
    %v945 = vrot.slane %v940, %v944
    %v947 = vadd.f32 %v934, %v945
    %v948 = vadd.f32 %v937, %v945
    %v949 = vmax.f32 %v947, 0.0
    %v950 = vmax.f32 %v948, 0.0
    %v951 = vmul.f32 %v949, %v949
    %v952 = vmul.f32 %v950, %v950
    %953 = vadd.xlane.f32.xlu0 %v951
    %v954 = vpop.xlane.xlu0 %953
    %955 = vadd.xlane.f32.xlu0 %v952
    %v956 = vpop.xlane.xlu0 %955
    %v957 = vmax.f32 %v954, 1e-12
    %v958 = vmax.f32 %v956, 1e-12
    %v959 = vrsqrt.pop %v957
    %v960 = vrsqrt.pop %v958
    %v961 = vmul.f32 %v949, %v959
    %v962 = vmul.f32 %v950, %v960
    %963 = vst [vmem:[#allocation2] sm:$0xff] %v961
    %964 = vst [vmem:[#allocation2 + $0x8] sm:$0xff] %v962
    // Predicated region
    $region34: #{tpu_custom_call.1} parent=1 // pred_check
      _
    $region35: #{tpu_custom_call.1} parent=1 // pred_check_branch
      %966 = sbr.rel (0) target = $region37
    $region36: #{tpu_custom_call.1} parent=1 // pred_region
      %s968 = ssub.s32 256, 256
      %969 = vsyncadd [#allocation3], %s968
      %s970 = sshll.u32 [#allocation2], 4
      %s971 = int_to_ptr.vmem [resolvable:$true] %s970
      %976 = dma.vmem_to_hbm [thread:$0]  %s971, 256, %s8, [#allocation3], 128, 128, 8
    $region37: #{tpu_custom_call.1} parent=1 // pred_fallthru
      _
    // Predicated region
    $region38: #{tpu_custom_call.1} parent=1 // pred_check
      _
    $region39: #{tpu_custom_call.1} parent=1 // pred_check_branch
      %978 = sbr.rel (0) target = $region41
    $region40: #{tpu_custom_call.1} parent=1 // pred_region
      %979 = dma.done [#allocation3], 256
    $region41: #{tpu_custom_call.1} parent=1 // pred_fallthru
      _
    %980 = vsyncpa [#allocation3], 1

</llo_original>
